<compile_context>
chip_gen: v7x
topology: tpu7x:2x2x1
jax: 0.10.0
libtpu: 0.0.40
codegen_flags: <defaults>
</compile_context>

<pallas_src>
import functools

import jax
import jax.numpy as jnp
from jax.experimental import pallas as pl
from jax.experimental.pallas import tpu as pltpu

LANE = 128


def _round_up(v, m):
    return ((v + m - 1) // m) * m


def _pad2(a, rows, cols):
    out = jnp.zeros((rows, cols), a.dtype)
    return out.at[:a.shape[0], :a.shape[1]].set(a)


# ----------------------------- Pallas kernel ------------------------------- #

def _fused_rgcn_kernel(x_ref, ap_ref, w_ref, wroot_ref, bias_ref,
                       wlast_ref, blast_ref, pool_ref, out_ref, y_ref, *,
                       num_layers, num_relations, nodes_pad):
    """Full MyRGCN forward (all layers + mean pool) in one kernel.

    x_ref     : (Np, CP)          bf16  zero-padded node features
    ap_ref    : (Np, R*Np)        bf16  A'[i, r*Np+j] = adj_norm[r, i, j]
    w_ref     : (L-1, R, CP, CP)  bf16  hidden-layer relation weights (padded)
    wroot_ref : (L-1, CP, CP)     bf16  hidden-layer root weights (padded)
    bias_ref  : (L-1, 1, CP)      f32   hidden-layer biases (padded)
    wlast_ref : (R+1, CP, CP)     bf16  last layer: [root, W_0, ..., W_{R-1}]
    blast_ref : (1, CP)           f32   last-layer bias
    pool_ref  : (R+1, Np)         bf16  [1/N*1ᵀ ; 1/N*1ᵀA_0 ; ... ]
    out_ref   : (1, CP)           f32   graph readout (mean over real nodes)
    y_ref     : (R*Np, CP)        bf16  scratch for per-relation h @ W_r
    """
    npad = nodes_pad
    h_b = x_ref[...]                                   # (Np, CP) bf16
    ap = ap_ref[...]                                   # (Np, R*Np) bf16

    # Hidden layers (static unroll, L small).
    for l in range(num_layers - 1):
        # Per-relation feature transform into contiguous rows of the scratch.
        for r in range(num_relations):                 # static unroll (R small)
            y_ref[r * npad:(r + 1) * npad, :] = jnp.dot(
                h_b, w_ref[l, r],
                preferred_element_type=jnp.float32).astype(jnp.bfloat16)
        # Root/self transform + bias.
        acc = jnp.dot(h_b, wroot_ref[l],
                      preferred_element_type=jnp.float32) + bias_ref[l]
        # All-relation mean aggregation as ONE deep-K MXU matmul:
        #   acc[i] += sum_r sum_j adj[r,i,j] * (h @ W_r)[j]
        acc += jnp.dot(ap, y_ref[...], preferred_element_type=jnp.float32)
        # ReLU; Dropout(p=0) is the identity.
        h_b = jnp.maximum(acc, 0.0).astype(jnp.bfloat16)

    # Last layer folded with the global mean pool (exact up to fp order):
    #   mean_i(h Wroot + b + sum_r A_r h W_r)
    #     = (1/N 1ᵀ h) Wroot + b + sum_r ((1/N 1ᵀ A_r) h) W_r
    z = jnp.dot(pool_ref[...], h_b, preferred_element_type=jnp.float32)
    zb = z.astype(jnp.bfloat16)                        # (R+1, CP)
    out = blast_ref[...]                               # start from the bias
    for k in range(num_relations + 1):                 # static unroll (R+1 tiny)
        out = out + jnp.dot(zb[k:k + 1, :], wlast_ref[k],
                            preferred_element_type=jnp.float32)
    out_ref[...] = out


# ------------------------------- JAX glue ---------------------------------- #

def build_norm_adj(edge_index, edge_type, num_nodes, num_relations):
    """Dense per-relation adjacency, row-normalized (PyG 'mean' aggregation)."""
    src = edge_index[0]
    dst = edge_index[1]
    adj = jnp.zeros((num_relations, num_nodes, num_nodes), jnp.float32)
    adj = adj.at[edge_type, dst, src].add(1.0)
    deg = adj.sum(axis=2, keepdims=True)
    return adj / jnp.maximum(deg, 1.0)


def my_rgcn_forward(params, x, edge_index, edge_type, num_relations):
    num_nodes, in_ch = x.shape
    num_layers = len(params)
    assert num_layers >= 2, "MyRGCN always builds at least two conv layers"
    out_ch = params[-1][1].shape[1]
    max_ch = max([in_ch] + [w.shape[2] for (w, _, _) in params])
    cp = max(LANE, _round_up(max_ch, LANE))            # lane-dense channels
    npad = max(LANE, _round_up(num_nodes, LANE))       # lane-dense node axis

    # Row-normalized dense adjacency (f32), then padded + relation-stacked on
    # the contraction axis:  A'[i, r*Np + j] = adj_norm[r, i, j].
    adj = build_norm_adj(edge_index, edge_type, num_nodes, num_relations)
    adj_pad = jnp.zeros((num_relations, npad, npad), jnp.float32)
    adj_pad = adj_pad.at[:, :num_nodes, :num_nodes].set(adj)
    a_prime = adj_pad.transpose(1, 0, 2).reshape(
        npad, num_relations * npad).astype(jnp.bfloat16)

    # Pooling matrix: row 0 = mean over the *logical* nodes; row r+1 = 1/N 1ᵀA_r.
    # Padded columns are exactly zero so padded rows of h never leak.
    pool = jnp.zeros((num_relations + 1, npad), jnp.float32)
    pool = pool.at[0, :num_nodes].set(1.0 / num_nodes)
    pool = pool.at[1:, :num_nodes].set(adj.sum(axis=1) / num_nodes)
    pool = pool.astype(jnp.bfloat16)

    x_pad = _pad2(x, npad, cp).astype(jnp.bfloat16)

    # Hidden-layer (0 .. L-2) weights, channel-padded to 128 lanes.
    w_stack = jnp.stack([
        jnp.stack([_pad2(w[r], cp, cp) for r in range(num_relations)])
        for (w, _, _) in params[:-1]]).astype(jnp.bfloat16)     # (L-1,R,CP,CP)
    wroot_stack = jnp.stack(
        [_pad2(wr, cp, cp) for (_, wr, _) in params[:-1]]).astype(jnp.bfloat16)
    bias_stack = jnp.stack(
        [_pad2(b.reshape(1, -1), 1, cp) for (_, _, b) in params[:-1]])  # f32

    # Last layer: root weight at index 0, relation weights at 1..R.
    w_l, wr_l, b_l = params[-1]
    wlast_stack = jnp.stack(
        [_pad2(wr_l, cp, cp)] +
        [_pad2(w_l[r], cp, cp) for r in range(num_relations)]
    ).astype(jnp.bfloat16)                                       # (R+1,CP,CP)
    bias_last = _pad2(b_l.reshape(1, -1), 1, cp)                 # (1,CP) f32

    kernel = functools.partial(_fused_rgcn_kernel,
                               num_layers=num_layers,
                               num_relations=num_relations,
                               nodes_pad=npad)
    vmem = pltpu.MemorySpace.VMEM
    out_pad = pl.pallas_call(
        kernel,
        out_shape=jax.ShapeDtypeStruct((1, cp), jnp.float32),
        in_specs=[pl.BlockSpec(memory_space=vmem)] * 8,
        out_specs=pl.BlockSpec(memory_space=vmem),
        scratch_shapes=[pltpu.VMEM((num_relations * npad, cp), jnp.bfloat16)],
    )(x_pad, a_prime, w_stack, wroot_stack, bias_stack,
      wlast_stack, bias_last, pool)

    return out_pad[:, :out_ch]


# ------------------------------ References --------------------------------- #

def reference_forward_bf16(params, x, edge_index, edge_type, num_relations):
    """Pure-JAX reference mirroring the kernel's bf16-input / f32-accum math."""
    num_nodes = x.shape[0]
    num_layers = len(params)
    adj = build_norm_adj(edge_index, edge_type, num_nodes, num_relations)
    adj_b = adj.astype(jnp.bfloat16)
    pool = jnp.concatenate(
        [jnp.full((1, num_nodes), 1.0 / num_nodes, jnp.float32),
         adj.sum(axis=1) / num_nodes], axis=0).astype(jnp.bfloat16)

    h_b = x.astype(jnp.bfloat16)
    for l in range(num_layers - 1):
        w, w_root, bias = params[l]
        acc = jnp.dot(h_b, w_root.astype(jnp.bfloat16),
                      preferred_element_type=jnp.float32) + bias
        for r in range(num_relations):
            y_r = jnp.dot(h_b, w[r].astype(jnp.bfloat16),
                          preferred_element_type=jnp.float32).astype(jnp.bfloat16)
            acc += jnp.dot(adj_b[r], y_r, preferred_element_type=jnp.float32)
        h_b = jnp.maximum(acc, 0.0).astype(jnp.bfloat16)

    w, w_root, bias = params[-1]
    z = jnp.dot(pool, h_b, preferred_element_type=jnp.float32)
    zb = z.astype(jnp.bfloat16)
    out = bias.reshape(1, -1).astype(jnp.float32)
    out = out + jnp.dot(zb[0:1], w_root.astype(jnp.bfloat16),
                        preferred_element_type=jnp.float32)
    for r in range(num_relations):
        out = out + jnp.dot(zb[r + 1:r + 2], w[r].astype(jnp.bfloat16),
                            preferred_element_type=jnp.float32)
    return out


def reference_forward_f32(params, x, edge_index, edge_type, num_relations):
    """Pure-float32 reference in the original RGCNConv 'mean' formulation."""
    num_nodes = x.shape[0]
    adj = build_norm_adj(edge_index, edge_type, num_nodes, num_relations)
    h = x
    num_layers = len(params)
    for i, (w, w_root, bias) in enumerate(params):
        out = h @ w_root + bias
        for r in range(num_relations):
            out = out + adj[r] @ (h @ w[r])
        if i != num_layers - 1:
            out = jnp.maximum(out, 0.0)
        h = out
    return jnp.mean(h, axis=0, keepdims=True)


def init_params(key, in_ch, hidden_ch, out_ch, num_relations, num_layers):
    dims = [in_ch] + [hidden_ch] * (num_layers - 1) + [out_ch]
    params = []
    for i in range(num_layers):
        cin, cout = dims[i], dims[i + 1]
        key, k1, k2, k3 = jax.random.split(key, 4)
        scale = 1.0 / jnp.sqrt(jnp.float32(cin))
        w = jax.random.normal(k1, (num_relations, cin, cout), jnp.float32) * scale
        w_root = jax.random.normal(k2, (cin, cout), jnp.float32) * scale
        bias = jax.random.normal(k3, (cout,), jnp.float32) * 0.01
        params.append((w, w_root, bias))
    return params


# --------------------------------- main ------------------------------------ #

if __name__ == "__main__":
    key = jax.random.PRNGKey(0)

    num_nodes = 16
    num_edges = 48
    in_channels = 8
    hidden_channels = 32
    out_channels = 8
    num_relations = 3
    num_layers = 3

    key, kx, ke, kt, kp = jax.random.split(key, 5)
    x = jax.random.normal(kx, (num_nodes, in_channels), jnp.float32)
    edge_index = jax.random.randint(ke, (2, num_edges), 0, num_nodes,
                                    dtype=jnp.int32)
    edge_type = jax.random.randint(kt, (num_edges,), 0, num_relations,
                                   dtype=jnp.int32)

    params = init_params(kp, in_channels, hidden_channels, out_channels,
                         num_relations, num_layers)

    out = my_rgcn_forward(params, x, edge_index, edge_type, num_relations)
    out = jax.block_until_ready(out)
    assert out.shape == (1, out_channels)

    # Tight check vs the precision-mirrored reference (same bf16/f32 math,
    # same pooled-last-layer formulation).
    ref_b = reference_forward_bf16(params, x, edge_index, edge_type,
                                   num_relations)
    ref_b = jax.block_until_ready(ref_b)
    assert jnp.allclose(out, ref_b, rtol=5e-3, atol=5e-3), (out, ref_b)

    # Looser semantic check vs the pure-f32 original formulation
    # (gap is from bf16 MXU inputs, not from the pool/relation refactor).
    ref_f = reference_forward_f32(params, x, edge_index, edge_type,
                                  num_relations)
    ref_f = jax.block_until_ready(ref_f)
    assert jnp.allclose(out, ref_f, rtol=5e-2, atol=5e-2), (out, ref_f)

    print("KERNEL_OK")
</pallas_src>

<mosaic_0001>
module attributes {stable_mosaic.version = 11 : i64} {
  func.func @_fused_rgcn_kernel(%arg0: memref<128x128xbf16, #tpu.memory_space<vmem>>, %arg1: memref<128x384xbf16, #tpu.memory_space<vmem>>, %arg2: memref<2x3x128x128xbf16, #tpu.memory_space<vmem>>, %arg3: memref<2x128x128xbf16, #tpu.memory_space<vmem>>, %arg4: memref<2x1x128xf32, #tpu.memory_space<vmem>>, %arg5: memref<4x128x128xbf16, #tpu.memory_space<vmem>>, %arg6: memref<1x128xf32, #tpu.memory_space<vmem>>, %arg7: memref<4x128xbf16, #tpu.memory_space<vmem>>, %arg8: memref<1x128xf32, #tpu.memory_space<vmem>>, %arg9: memref<384x128xbf16, #tpu.memory_space<vmem>>) attributes {dimension_semantics = [], scalar_prefetch = 0 : i64, scratch_operands = 1 : i64, tpu.core_type = #tpu.core_type<tc>} {
    %c0 = arith.constant 0 : index
    %c0_0 = arith.constant 0 : index
    %0 = vector.load %arg0[%c0, %c0_0] : memref<128x128xbf16, #tpu.memory_space<vmem>>, vector<128x128xbf16>
    %c0_1 = arith.constant 0 : index
    %c0_2 = arith.constant 0 : index
    %1 = vector.load %arg1[%c0_1, %c0_2] : memref<128x384xbf16, #tpu.memory_space<vmem>>, vector<128x384xbf16>
    %c0_3 = arith.constant 0 : index
    %c0_4 = arith.constant 0 : index
    %c0_5 = arith.constant 0 : index
    %c0_6 = arith.constant 0 : index
    %2 = vector.load %arg2[%c0_3, %c0_4, %c0_5, %c0_6] : memref<2x3x128x128xbf16, #tpu.memory_space<vmem>>, vector<1x1x128x128xbf16>
    %3 = vector.shape_cast %2 : vector<1x1x128x128xbf16> to vector<128x128xbf16>
    %cst = arith.constant dense<0.000000e+00> : vector<128x128xf32>
    %4 = tpu.matmul %0, %3, %cst {dimension_numbers = #tpu.dot_dimension_numbers<[1], [0], [0], [1], [0, 0, 1, 1], [], []>} : vector<128x128xbf16>, vector<128x128xbf16>, vector<128x128xf32> -> vector<128x128xf32>
    %5 = arith.truncf %4 : vector<128x128xf32> to vector<128x128xbf16>
    %c0_7 = arith.constant 0 : index
    %c0_8 = arith.constant 0 : index
    %6 = vector.load %arg9[%c0_7, %c0_8] : memref<384x128xbf16, #tpu.memory_space<vmem>>, vector<128x128xbf16>
    tpu.vector_store %arg9[%c0_7, %c0_8], %5 {strides = array<i32>} : memref<384x128xbf16, #tpu.memory_space<vmem>>, vector<128x128xbf16>,
    %c0_9 = arith.constant 0 : index
    %c1 = arith.constant 1 : index
    %c0_10 = arith.constant 0 : index
    %c0_11 = arith.constant 0 : index
    %7 = vector.load %arg2[%c0_9, %c1, %c0_10, %c0_11] : memref<2x3x128x128xbf16, #tpu.memory_space<vmem>>, vector<1x1x128x128xbf16>
    %8 = vector.shape_cast %7 : vector<1x1x128x128xbf16> to vector<128x128xbf16>
    %cst_12 = arith.constant dense<0.000000e+00> : vector<128x128xf32>
    %9 = tpu.matmul %0, %8, %cst_12 {dimension_numbers = #tpu.dot_dimension_numbers<[1], [0], [0], [1], [0, 0, 1, 1], [], []>} : vector<128x128xbf16>, vector<128x128xbf16>, vector<128x128xf32> -> vector<128x128xf32>
    %10 = arith.truncf %9 : vector<128x128xf32> to vector<128x128xbf16>
    %c128 = arith.constant 128 : index
    %c0_13 = arith.constant 0 : index
    %11 = vector.load %arg9[%c128, %c0_13] : memref<384x128xbf16, #tpu.memory_space<vmem>>, vector<128x128xbf16>
    tpu.vector_store %arg9[%c128, %c0_13], %10 {strides = array<i32>} : memref<384x128xbf16, #tpu.memory_space<vmem>>, vector<128x128xbf16>,
    %c0_14 = arith.constant 0 : index
    %c2 = arith.constant 2 : index
    %c0_15 = arith.constant 0 : index
    %c0_16 = arith.constant 0 : index
    %12 = vector.load %arg2[%c0_14, %c2, %c0_15, %c0_16] : memref<2x3x128x128xbf16, #tpu.memory_space<vmem>>, vector<1x1x128x128xbf16>
    %13 = vector.shape_cast %12 : vector<1x1x128x128xbf16> to vector<128x128xbf16>
    %cst_17 = arith.constant dense<0.000000e+00> : vector<128x128xf32>
    %14 = tpu.matmul %0, %13, %cst_17 {dimension_numbers = #tpu.dot_dimension_numbers<[1], [0], [0], [1], [0, 0, 1, 1], [], []>} : vector<128x128xbf16>, vector<128x128xbf16>, vector<128x128xf32> -> vector<128x128xf32>
    %15 = arith.truncf %14 : vector<128x128xf32> to vector<128x128xbf16>
    %c256 = arith.constant 256 : index
    %c0_18 = arith.constant 0 : index
    %16 = vector.load %arg9[%c256, %c0_18] : memref<384x128xbf16, #tpu.memory_space<vmem>>, vector<128x128xbf16>
    tpu.vector_store %arg9[%c256, %c0_18], %15 {strides = array<i32>} : memref<384x128xbf16, #tpu.memory_space<vmem>>, vector<128x128xbf16>,
    %c0_19 = arith.constant 0 : index
    %c0_20 = arith.constant 0 : index
    %c0_21 = arith.constant 0 : index
    %17 = vector.load %arg3[%c0_19, %c0_20, %c0_21] : memref<2x128x128xbf16, #tpu.memory_space<vmem>>, vector<1x128x128xbf16>
    %18 = vector.shape_cast %17 : vector<1x128x128xbf16> to vector<128x128xbf16>
    %cst_22 = arith.constant dense<0.000000e+00> : vector<128x128xf32>
    %19 = tpu.matmul %0, %18, %cst_22 {dimension_numbers = #tpu.dot_dimension_numbers<[1], [0], [0], [1], [0, 0, 1, 1], [], []>} : vector<128x128xbf16>, vector<128x128xbf16>, vector<128x128xf32> -> vector<128x128xf32>
    %c0_23 = arith.constant 0 : index
    %c0_24 = arith.constant 0 : index
    %c0_25 = arith.constant 0 : index
    %20 = vector.load %arg4[%c0_23, %c0_24, %c0_25] : memref<2x1x128xf32, #tpu.memory_space<vmem>>, vector<1x1x128xf32>
    %21 = vector.shape_cast %20 : vector<1x1x128xf32> to vector<1x128xf32>
    %22 = vector.broadcast %21 : vector<1x128xf32> to vector<128x128xf32>
    %23 = arith.addf %19, %22 : vector<128x128xf32>
    %c0_26 = arith.constant 0 : index
    %c0_27 = arith.constant 0 : index
    %24 = vector.load %arg9[%c0_26, %c0_27] : memref<384x128xbf16, #tpu.memory_space<vmem>>, vector<384x128xbf16>
    %cst_28 = arith.constant dense<0.000000e+00> : vector<128x128xf32>
    %25 = tpu.matmul %1, %24, %cst_28 {dimension_numbers = #tpu.dot_dimension_numbers<[1], [0], [0], [1], [0, 0, 1, 1], [], []>} : vector<128x384xbf16>, vector<384x128xbf16>, vector<128x128xf32> -> vector<128x128xf32>
    %26 = arith.addf %23, %25 : vector<128x128xf32>
    %cst_29 = arith.constant 0.000000e+00 : f32
    %27 = vector.broadcast %cst_29 : f32 to vector<128x128xf32>
    %28 = arith.maximumf %26, %27 : vector<128x128xf32>
    %29 = arith.truncf %28 : vector<128x128xf32> to vector<128x128xbf16>
    %c1_30 = arith.constant 1 : index
    %c0_31 = arith.constant 0 : index
    %c0_32 = arith.constant 0 : index
    %c0_33 = arith.constant 0 : index
    %30 = vector.load %arg2[%c1_30, %c0_31, %c0_32, %c0_33] : memref<2x3x128x128xbf16, #tpu.memory_space<vmem>>, vector<1x1x128x128xbf16>
    %31 = vector.shape_cast %30 : vector<1x1x128x128xbf16> to vector<128x128xbf16>
    %cst_34 = arith.constant dense<0.000000e+00> : vector<128x128xf32>
    %32 = tpu.matmul %29, %31, %cst_34 {dimension_numbers = #tpu.dot_dimension_numbers<[1], [0], [0], [1], [0, 0, 1, 1], [], []>} : vector<128x128xbf16>, vector<128x128xbf16>, vector<128x128xf32> -> vector<128x128xf32>
    %33 = arith.truncf %32 : vector<128x128xf32> to vector<128x128xbf16>
    %c0_35 = arith.constant 0 : index
    %c0_36 = arith.constant 0 : index
    %34 = vector.load %arg9[%c0_35, %c0_36] : memref<384x128xbf16, #tpu.memory_space<vmem>>, vector<128x128xbf16>
    tpu.vector_store %arg9[%c0_35, %c0_36], %33 {strides = array<i32>} : memref<384x128xbf16, #tpu.memory_space<vmem>>, vector<128x128xbf16>,
    %c1_37 = arith.constant 1 : index
    %c1_38 = arith.constant 1 : index
    %c0_39 = arith.constant 0 : index
    %c0_40 = arith.constant 0 : index
    %35 = vector.load %arg2[%c1_37, %c1_38, %c0_39, %c0_40] : memref<2x3x128x128xbf16, #tpu.memory_space<vmem>>, vector<1x1x128x128xbf16>
    %36 = vector.shape_cast %35 : vector<1x1x128x128xbf16> to vector<128x128xbf16>
    %cst_41 = arith.constant dense<0.000000e+00> : vector<128x128xf32>
    %37 = tpu.matmul %29, %36, %cst_41 {dimension_numbers = #tpu.dot_dimension_numbers<[1], [0], [0], [1], [0, 0, 1, 1], [], []>} : vector<128x128xbf16>, vector<128x128xbf16>, vector<128x128xf32> -> vector<128x128xf32>
    %38 = arith.truncf %37 : vector<128x128xf32> to vector<128x128xbf16>
    %c128_42 = arith.constant 128 : index
    %c0_43 = arith.constant 0 : index
    %39 = vector.load %arg9[%c128_42, %c0_43] : memref<384x128xbf16, #tpu.memory_space<vmem>>, vector<128x128xbf16>
    tpu.vector_store %arg9[%c128_42, %c0_43], %38 {strides = array<i32>} : memref<384x128xbf16, #tpu.memory_space<vmem>>, vector<128x128xbf16>,
    %c1_44 = arith.constant 1 : index
    %c2_45 = arith.constant 2 : index
    %c0_46 = arith.constant 0 : index
    %c0_47 = arith.constant 0 : index
    %40 = vector.load %arg2[%c1_44, %c2_45, %c0_46, %c0_47] : memref<2x3x128x128xbf16, #tpu.memory_space<vmem>>, vector<1x1x128x128xbf16>
    %41 = vector.shape_cast %40 : vector<1x1x128x128xbf16> to vector<128x128xbf16>
    %cst_48 = arith.constant dense<0.000000e+00> : vector<128x128xf32>
    %42 = tpu.matmul %29, %41, %cst_48 {dimension_numbers = #tpu.dot_dimension_numbers<[1], [0], [0], [1], [0, 0, 1, 1], [], []>} : vector<128x128xbf16>, vector<128x128xbf16>, vector<128x128xf32> -> vector<128x128xf32>
    %43 = arith.truncf %42 : vector<128x128xf32> to vector<128x128xbf16>
    %c256_49 = arith.constant 256 : index
    %c0_50 = arith.constant 0 : index
    %44 = vector.load %arg9[%c256_49, %c0_50] : memref<384x128xbf16, #tpu.memory_space<vmem>>, vector<128x128xbf16>
    tpu.vector_store %arg9[%c256_49, %c0_50], %43 {strides = array<i32>} : memref<384x128xbf16, #tpu.memory_space<vmem>>, vector<128x128xbf16>,
    %c1_51 = arith.constant 1 : index
    %c0_52 = arith.constant 0 : index
    %c0_53 = arith.constant 0 : index
    %45 = vector.load %arg3[%c1_51, %c0_52, %c0_53] : memref<2x128x128xbf16, #tpu.memory_space<vmem>>, vector<1x128x128xbf16>
    %46 = vector.shape_cast %45 : vector<1x128x128xbf16> to vector<128x128xbf16>
    %cst_54 = arith.constant dense<0.000000e+00> : vector<128x128xf32>
    %47 = tpu.matmul %29, %46, %cst_54 {dimension_numbers = #tpu.dot_dimension_numbers<[1], [0], [0], [1], [0, 0, 1, 1], [], []>} : vector<128x128xbf16>, vector<128x128xbf16>, vector<128x128xf32> -> vector<128x128xf32>
    %c1_55 = arith.constant 1 : index
    %c0_56 = arith.constant 0 : index
    %c0_57 = arith.constant 0 : index
    %48 = vector.load %arg4[%c1_55, %c0_56, %c0_57] : memref<2x1x128xf32, #tpu.memory_space<vmem>>, vector<1x1x128xf32>
    %49 = vector.shape_cast %48 : vector<1x1x128xf32> to vector<1x128xf32>
    %50 = vector.broadcast %49 : vector<1x128xf32> to vector<128x128xf32>
    %51 = arith.addf %47, %50 : vector<128x128xf32>
    %c0_58 = arith.constant 0 : index
    %c0_59 = arith.constant 0 : index
    %52 = vector.load %arg9[%c0_58, %c0_59] : memref<384x128xbf16, #tpu.memory_space<vmem>>, vector<384x128xbf16>
    %cst_60 = arith.constant dense<0.000000e+00> : vector<128x128xf32>
    %53 = tpu.matmul %1, %52, %cst_60 {dimension_numbers = #tpu.dot_dimension_numbers<[1], [0], [0], [1], [0, 0, 1, 1], [], []>} : vector<128x384xbf16>, vector<384x128xbf16>, vector<128x128xf32> -> vector<128x128xf32>
    %54 = arith.addf %51, %53 : vector<128x128xf32>
    %cst_61 = arith.constant 0.000000e+00 : f32
    %55 = vector.broadcast %cst_61 : f32 to vector<128x128xf32>
    %56 = arith.maximumf %54, %55 : vector<128x128xf32>
    %57 = arith.truncf %56 : vector<128x128xf32> to vector<128x128xbf16>
    %c0_62 = arith.constant 0 : index
    %c0_63 = arith.constant 0 : index
    %58 = vector.load %arg7[%c0_62, %c0_63] : memref<4x128xbf16, #tpu.memory_space<vmem>>, vector<4x128xbf16>
    %cst_64 = arith.constant dense<0.000000e+00> : vector<4x128xf32>
    %59 = tpu.matmul %58, %57, %cst_64 {dimension_numbers = #tpu.dot_dimension_numbers<[1], [0], [0], [1], [0, 0, 1, 1], [], []>} : vector<4x128xbf16>, vector<128x128xbf16>, vector<4x128xf32> -> vector<4x128xf32>
    %60 = arith.truncf %59 : vector<4x128xf32> to vector<4x128xbf16>
    %c0_65 = arith.constant 0 : index
    %c0_66 = arith.constant 0 : index
    %61 = vector.load %arg6[%c0_65, %c0_66] : memref<1x128xf32, #tpu.memory_space<vmem>>, vector<1x128xf32>
    %62 = vector.extract_strided_slice %60 {offsets = [0, 0], sizes = [1, 128], strides = [1, 1]} : vector<4x128xbf16> to vector<1x128xbf16>
    %c0_67 = arith.constant 0 : index
    %c0_68 = arith.constant 0 : index
    %c0_69 = arith.constant 0 : index
    %63 = vector.load %arg5[%c0_67, %c0_68, %c0_69] : memref<4x128x128xbf16, #tpu.memory_space<vmem>>, vector<1x128x128xbf16>
    %64 = vector.shape_cast %63 : vector<1x128x128xbf16> to vector<128x128xbf16>
    %cst_70 = arith.constant dense<0.000000e+00> : vector<1x128xf32>
    %65 = tpu.matmul %62, %64, %cst_70 {dimension_numbers = #tpu.dot_dimension_numbers<[1], [0], [0], [1], [0, 0, 1, 1], [], []>} : vector<1x128xbf16>, vector<128x128xbf16>, vector<1x128xf32> -> vector<1x128xf32>
    %66 = arith.addf %61, %65 : vector<1x128xf32>
    %67 = vector.extract_strided_slice %60 {offsets = [1, 0], sizes = [1, 128], strides = [1, 1]} : vector<4x128xbf16> to vector<1x128xbf16>
    %c1_71 = arith.constant 1 : index
    %c0_72 = arith.constant 0 : index
    %c0_73 = arith.constant 0 : index
    %68 = vector.load %arg5[%c1_71, %c0_72, %c0_73] : memref<4x128x128xbf16, #tpu.memory_space<vmem>>, vector<1x128x128xbf16>
    %69 = vector.shape_cast %68 : vector<1x128x128xbf16> to vector<128x128xbf16>
    %cst_74 = arith.constant dense<0.000000e+00> : vector<1x128xf32>
    %70 = tpu.matmul %67, %69, %cst_74 {dimension_numbers = #tpu.dot_dimension_numbers<[1], [0], [0], [1], [0, 0, 1, 1], [], []>} : vector<1x128xbf16>, vector<128x128xbf16>, vector<1x128xf32> -> vector<1x128xf32>
    %71 = arith.addf %66, %70 : vector<1x128xf32>
    %72 = vector.extract_strided_slice %60 {offsets = [2, 0], sizes = [1, 128], strides = [1, 1]} : vector<4x128xbf16> to vector<1x128xbf16>
    %c2_75 = arith.constant 2 : index
    %c0_76 = arith.constant 0 : index
    %c0_77 = arith.constant 0 : index
    %73 = vector.load %arg5[%c2_75, %c0_76, %c0_77] : memref<4x128x128xbf16, #tpu.memory_space<vmem>>, vector<1x128x128xbf16>
    %74 = vector.shape_cast %73 : vector<1x128x128xbf16> to vector<128x128xbf16>
    %cst_78 = arith.constant dense<0.000000e+00> : vector<1x128xf32>
    %75 = tpu.matmul %72, %74, %cst_78 {dimension_numbers = #tpu.dot_dimension_numbers<[1], [0], [0], [1], [0, 0, 1, 1], [], []>} : vector<1x128xbf16>, vector<128x128xbf16>, vector<1x128xf32> -> vector<1x128xf32>
    %76 = arith.addf %71, %75 : vector<1x128xf32>
    %77 = vector.extract_strided_slice %60 {offsets = [3, 0], sizes = [1, 128], strides = [1, 1]} : vector<4x128xbf16> to vector<1x128xbf16>
    %c3 = arith.constant 3 : index
    %c0_79 = arith.constant 0 : index
    %c0_80 = arith.constant 0 : index
    %78 = vector.load %arg5[%c3, %c0_79, %c0_80] : memref<4x128x128xbf16, #tpu.memory_space<vmem>>, vector<1x128x128xbf16>
    %79 = vector.shape_cast %78 : vector<1x128x128xbf16> to vector<128x128xbf16>
    %cst_81 = arith.constant dense<0.000000e+00> : vector<1x128xf32>
    %80 = tpu.matmul %77, %79, %cst_81 {dimension_numbers = #tpu.dot_dimension_numbers<[1], [0], [0], [1], [0, 0, 1, 1], [], []>} : vector<1x128xbf16>, vector<128x128xbf16>, vector<1x128xf32> -> vector<1x128xf32>
    %81 = arith.addf %76, %80 : vector<1x128xf32>
    %c0_82 = arith.constant 0 : index
    %c0_83 = arith.constant 0 : index
    %82 = vector.load %arg8[%c0_82, %c0_83] : memref<1x128xf32, #tpu.memory_space<vmem>>, vector<1x128xf32>
    tpu.vector_store %arg8[%c0_82, %c0_83], %81 {strides = array<i32>} : memref<1x128xf32, #tpu.memory_space<vmem>>, vector<1x128xf32>,
    return
  }
}

</mosaic_0001>

<llo_original>
// kernel: tpu_custom_call.1
$region0: #{tpu_custom_call.1}
  #allocation0 [shape = 'u32[]', space=smem, size = 0x4, offset = 0x4, fixed_abs, tag = 'smem constant byte address 0x4 - core index']
  #allocation1 [shape = 'u32[144,128]{1,0:T(1,128)}', space=vmem, size = 0x12000, scoped, tag = 'internal scratch']
  #allocation2 [shape = 'bf16[384,128]{1,0:T(16,128)(2,1)}', space=vmem, size = 0x18000, scoped, tag = 'scratch operand']
  %s0 = inlined_call_operand.hbm [shape: bf16[128,128], index: 0, kind: input, shape index: {}]
  %s1 = inlined_call_operand.hbm [shape: bf16[128,384], index: 1, kind: input, shape index: {}]
  %s2 = inlined_call_operand.hbm [shape: bf16[2,3,128,128], index: 2, kind: input, shape index: {}]
  %s3 = inlined_call_operand.hbm [shape: bf16[2,128,128], index: 3, kind: input, shape index: {}]
  %s4 = inlined_call_operand.vmem [shape: f32[2,1,128], index: 4, kind: input, shape index: {}]
  %s5 = inlined_call_operand.hbm [shape: bf16[4,128,128], index: 5, kind: input, shape index: {}]
  %s6 = inlined_call_operand.vmem [shape: f32[1,128], index: 6, kind: input, shape index: {}]
  %s7 = inlined_call_operand.vmem [shape: bf16[4,128], index: 7, kind: input, shape index: {}]
  %s8 = inlined_call_operand.hbm [shape: f32[1,128], index: 8, kind: output, shape index: {}]
  %s9 = sld [smem:[#allocation0]]
  $region62: #{tpu_custom_call.1} parent=0
    _
  %s11 = ssub.s32 1, %s9
  %s12 = scalar_select 0, %s11, %s9
  $region1: #{tpu_custom_call.1} parent=0
    #allocation3 [shape = 'u8[32768]{0}', space=vmem, size = 0x8000, scoped, tag = 'input window, operand 0, single buffered']
    #allocation4 [shape = 's32[1]{0}', space=sflag, size = 0x4, scoped, tag = 'scoped memory for tpu_custom_call.1']
    #allocation5 [shape = 's32[1]{0}', space=sflag, size = 0x4, scoped, tag = 'scoped memory for tpu_custom_call.1']
    #allocation6 [shape = 'u8[98304]{0}', space=vmem, size = 0x18000, scoped, tag = 'input window, operand 1, single buffered']
    #allocation7 [shape = 's32[1]{0}', space=sflag, size = 0x4, scoped, tag = 'scoped memory for tpu_custom_call.1']
    #allocation8 [shape = 'u8[196608]{0}', space=vmem, size = 0x30000, scoped, tag = 'input window, operand 2, single buffered']
    #allocation9 [shape = 'u8[65536]{0}', space=vmem, size = 0x10000, scoped, tag = 'input window, operand 3, single buffered']
    #allocation10 [shape = 's32[1]{0}', space=sflag, size = 0x4, scoped, tag = 'scoped memory for tpu_custom_call.1']
    #allocation11 [shape = 'u8[131072]{0}', space=vmem, size = 0x20000, scoped, tag = 'input window, operand 5, single buffered']
    #allocation12 [shape = 'u8[512]{0}', space=vmem, size = 0x400, scoped, tag = 'output window, operand 0, single buffered']
    %13 = vsyncpa [#allocation4], 0
    %14 = vsyncpa [#allocation7], 0
    %15 = vsyncpa [#allocation10], 0
    %16 = vsyncpa [#allocation5], 0
    // Predicated region
    $region2: #{tpu_custom_call.1} parent=1 // pred_check
      _
    $region3: #{tpu_custom_call.1} parent=1 // pred_check_branch
      %18 = sbr.rel (0) target = $region5
    $region4: #{tpu_custom_call.1} parent=1 // pred_region
      %s20 = ssub.s32 1024, 1024
      %21 = vsyncadd [#allocation4], %s20
      %s22 = sshll.u32 [#allocation3], 4
      %s23 = int_to_ptr.vmem [resolvable:$true] %s22
      %28 = dma.hbm_to_vmem [thread:$0]  %s0, 1024, %s23, [#allocation4], 64, 64, 4
    $region5: #{tpu_custom_call.1} parent=1 // pred_fallthru
      _
    // Predicated region
    $region6: #{tpu_custom_call.1} parent=1 // pred_check
      _
    $region7: #{tpu_custom_call.1} parent=1 // pred_check_branch
      %30 = sbr.rel (0) target = $region9
    $region8: #{tpu_custom_call.1} parent=1 // pred_region
      %s32 = ssub.s32 3072, 3072
      %33 = vsyncadd [#allocation7], %s32
      %s34 = sshll.u32 [#allocation6], 4
      %s35 = int_to_ptr.vmem [resolvable:$true] %s34
      %40 = dma.hbm_to_vmem [thread:$0]  %s1, 3072, %s35, [#allocation7], 192, 192, 12
    $region9: #{tpu_custom_call.1} parent=1 // pred_fallthru
      _
    // Predicated region
    $region10: #{tpu_custom_call.1} parent=1 // pred_check
      _
    $region11: #{tpu_custom_call.1} parent=1 // pred_check_branch
      %42 = sbr.rel (0) target = $region13
    $region12: #{tpu_custom_call.1} parent=1 // pred_region
      %s44 = ssub.s32 6144, 6144
      %45 = vsyncadd [#allocation7], %s44
      %s46 = sshll.u32 [#allocation8], 4
      %s47 = int_to_ptr.vmem [resolvable:$true] %s46
      %52 = dma.hbm_to_vmem [thread:$0]  %s2, 6144, %s47, [#allocation7], 64, 64, 4
    $region13: #{tpu_custom_call.1} parent=1 // pred_fallthru
      _
    // Predicated region
    $region14: #{tpu_custom_call.1} parent=1 // pred_check
      _
    $region15: #{tpu_custom_call.1} parent=1 // pred_check_branch
      %54 = sbr.rel (0) target = $region17
    $region16: #{tpu_custom_call.1} parent=1 // pred_region
      %s56 = ssub.s32 2048, 2048
      %57 = vsyncadd [#allocation10], %s56
      %s58 = sshll.u32 [#allocation9], 4
      %s59 = int_to_ptr.vmem [resolvable:$true] %s58
      %64 = dma.hbm_to_vmem [thread:$0]  %s3, 2048, %s59, [#allocation10], 64, 64, 4
    $region17: #{tpu_custom_call.1} parent=1 // pred_fallthru
      _
    // Predicated region
    $region18: #{tpu_custom_call.1} parent=1 // pred_check
      _
    $region19: #{tpu_custom_call.1} parent=1 // pred_check_branch
      %66 = sbr.rel (0) target = $region21
    $region20: #{tpu_custom_call.1} parent=1 // pred_region
      _
    $region21: #{tpu_custom_call.1} parent=1 // pred_fallthru
      _
    // Predicated region
    $region22: #{tpu_custom_call.1} parent=1 // pred_check
      _
    $region23: #{tpu_custom_call.1} parent=1 // pred_check_branch
      %68 = sbr.rel (0) target = $region25
    $region24: #{tpu_custom_call.1} parent=1 // pred_region
      %s70 = ssub.s32 4096, 4096
      %71 = vsyncadd [#allocation10], %s70
      %s72 = sshll.u32 [#allocation11], 4
      %s73 = int_to_ptr.vmem [resolvable:$true] %s72
      %78 = dma.hbm_to_vmem [thread:$0]  %s5, 4096, %s73, [#allocation10], 64, 64, 4
    $region25: #{tpu_custom_call.1} parent=1 // pred_fallthru
      _
    // Predicated region
    $region26: #{tpu_custom_call.1} parent=1 // pred_check
      _
    $region27: #{tpu_custom_call.1} parent=1 // pred_check_branch
      %80 = sbr.rel (0) target = $region29
    $region28: #{tpu_custom_call.1} parent=1 // pred_region
      _
    $region29: #{tpu_custom_call.1} parent=1 // pred_fallthru
      _
    // Predicated region
    $region30: #{tpu_custom_call.1} parent=1 // pred_check
      _
    $region31: #{tpu_custom_call.1} parent=1 // pred_check_branch
      %82 = sbr.rel (0) target = $region33
    $region32: #{tpu_custom_call.1} parent=1 // pred_region
      _
    $region33: #{tpu_custom_call.1} parent=1 // pred_fallthru
      _
    // Predicated region
    $region34: #{tpu_custom_call.1} parent=1 // pred_check
      _
    $region35: #{tpu_custom_call.1} parent=1 // pred_check_branch
      %84 = sbr.rel (0) target = $region37
    $region36: #{tpu_custom_call.1} parent=1 // pred_region
      %85 = dma.done [#allocation4], 1024
    $region37: #{tpu_custom_call.1} parent=1 // pred_fallthru
      _
    // Predicated region
    $region38: #{tpu_custom_call.1} parent=1 // pred_check
      _
    $region39: #{tpu_custom_call.1} parent=1 // pred_check_branch
      %87 = sbr.rel (0) target = $region41
    $region40: #{tpu_custom_call.1} parent=1 // pred_region
      %88 = dma.done [#allocation7], 3072
    $region41: #{tpu_custom_call.1} parent=1 // pred_fallthru
      _
    // Predicated region
    $region42: #{tpu_custom_call.1} parent=1 // pred_check
      _
    $region43: #{tpu_custom_call.1} parent=1 // pred_check_branch
      %90 = sbr.rel (0) target = $region45
    $region44: #{tpu_custom_call.1} parent=1 // pred_region
      %91 = dma.done [#allocation7], 6144
    $region45: #{tpu_custom_call.1} parent=1 // pred_fallthru
      _
    // Predicated region
    $region46: #{tpu_custom_call.1} parent=1 // pred_check
      _
    $region47: #{tpu_custom_call.1} parent=1 // pred_check_branch
      %93 = sbr.rel (0) target = $region49
    $region48: #{tpu_custom_call.1} parent=1 // pred_region
      %94 = dma.done [#allocation10], 2048
    $region49: #{tpu_custom_call.1} parent=1 // pred_fallthru
      _
    // Predicated region
    $region50: #{tpu_custom_call.1} parent=1 // pred_check
      _
    $region51: #{tpu_custom_call.1} parent=1 // pred_check_branch
      %96 = sbr.rel (0) target = $region53
    $region52: #{tpu_custom_call.1} parent=1 // pred_region
      %97 = dma.done [#allocation10], 4096
    $region53: #{tpu_custom_call.1} parent=1 // pred_fallthru
      _
    %v99 = vld [vmem:[#allocation3] sm:$0xf]
    %v100 = vld [vmem:[#allocation3 + $0x4] sm:$0xf]
    %v101 = vld [vmem:[#allocation3 + $0x8] sm:$0xf]
    %v102 = vld [vmem:[#allocation3 + $0xc] sm:$0xf]
    %v103 = vld [vmem:[#allocation3 + $0x10] sm:$0xf]
    %v104 = vld [vmem:[#allocation3 + $0x14] sm:$0xf]
    %v105 = vld [vmem:[#allocation3 + $0x18] sm:$0xf]
    %v106 = vld [vmem:[#allocation3 + $0x1c] sm:$0xf]
    %v107 = vld [vmem:[#allocation3 + $0x20] sm:$0xf]
    %v108 = vld [vmem:[#allocation3 + $0x24] sm:$0xf]
    %v109 = vld [vmem:[#allocation3 + $0x28] sm:$0xf]
    %v110 = vld [vmem:[#allocation3 + $0x2c] sm:$0xf]
    %v111 = vld [vmem:[#allocation3 + $0x30] sm:$0xf]
    %v112 = vld [vmem:[#allocation3 + $0x34] sm:$0xf]
    %v113 = vld [vmem:[#allocation3 + $0x38] sm:$0xf]
    %v114 = vld [vmem:[#allocation3 + $0x3c] sm:$0xf]
    %v115 = vld [vmem:[#allocation6] sm:$0xff]
    %v116 = vld [vmem:[#allocation6 + $0x8] sm:$0xf]
    %v117 = vld [vmem:[#allocation6 + $0xc] sm:$0xff]
    %v118 = vld [vmem:[#allocation6 + $0x14] sm:$0xf]
    %v119 = vld [vmem:[#allocation6 + $0x18] sm:$0xff]
    %v120 = vld [vmem:[#allocation6 + $0x20] sm:$0xf]
    %v121 = vld [vmem:[#allocation6 + $0x24] sm:$0xff]
    %v122 = vld [vmem:[#allocation6 + $0x2c] sm:$0xf]
    %v123 = vld [vmem:[#allocation6 + $0x30] sm:$0xff]
    %v124 = vld [vmem:[#allocation6 + $0x38] sm:$0xf]
    %v125 = vld [vmem:[#allocation6 + $0x3c] sm:$0xff]
    %v126 = vld [vmem:[#allocation6 + $0x44] sm:$0xf]
    %v127 = vld [vmem:[#allocation6 + $0x48] sm:$0xff]
    %v128 = vld [vmem:[#allocation6 + $0x50] sm:$0xf]
    %v129 = vld [vmem:[#allocation6 + $0x54] sm:$0xff]
    %v130 = vld [vmem:[#allocation6 + $0x5c] sm:$0xf]
    %v131 = vld [vmem:[#allocation6 + $0x60] sm:$0xff]
    %v132 = vld [vmem:[#allocation6 + $0x68] sm:$0xf]
    %v133 = vld [vmem:[#allocation6 + $0x6c] sm:$0xff]
    %v134 = vld [vmem:[#allocation6 + $0x74] sm:$0xf]
    %v135 = vld [vmem:[#allocation6 + $0x78] sm:$0xff]
    %v136 = vld [vmem:[#allocation6 + $0x80] sm:$0xf]
    %v137 = vld [vmem:[#allocation6 + $0x84] sm:$0xff]
    %v138 = vld [vmem:[#allocation6 + $0x8c] sm:$0xf]
    %v139 = vld [vmem:[#allocation6 + $0x90] sm:$0xff]
    %v140 = vld [vmem:[#allocation6 + $0x98] sm:$0xf]
    %v141 = vld [vmem:[#allocation6 + $0x9c] sm:$0xff]
    %v142 = vld [vmem:[#allocation6 + $0xa4] sm:$0xf]
    %v143 = vld [vmem:[#allocation6 + $0xa8] sm:$0xff]
    %v144 = vld [vmem:[#allocation6 + $0xb0] sm:$0xf]
    %v145 = vld [vmem:[#allocation6 + $0xb4] sm:$0xff]
    %v146 = vld [vmem:[#allocation6 + $0xbc] sm:$0xf]
    %v147 = vld [vmem:[#allocation8] sm:$0xf]
    %v148 = vld [vmem:[#allocation8 + $0x4] sm:$0xf]
    %v149 = vld [vmem:[#allocation8 + $0x8] sm:$0xf]
    %v150 = vld [vmem:[#allocation8 + $0xc] sm:$0xf]
    %v151 = vld [vmem:[#allocation8 + $0x10] sm:$0xf]
    %v152 = vld [vmem:[#allocation8 + $0x14] sm:$0xf]
    %v153 = vld [vmem:[#allocation8 + $0x18] sm:$0xf]
    %v154 = vld [vmem:[#allocation8 + $0x1c] sm:$0xf]
    %v155 = vld [vmem:[#allocation8 + $0x20] sm:$0xf]
    %v156 = vld [vmem:[#allocation8 + $0x24] sm:$0xf]
    %v157 = vld [vmem:[#allocation8 + $0x28] sm:$0xf]
    %v158 = vld [vmem:[#allocation8 + $0x2c] sm:$0xf]
    %v159 = vld [vmem:[#allocation8 + $0x30] sm:$0xf]
    %v160 = vld [vmem:[#allocation8 + $0x34] sm:$0xf]
    %v161 = vld [vmem:[#allocation8 + $0x38] sm:$0xf]
    %v162 = vld [vmem:[#allocation8 + $0x3c] sm:$0xf]
    %v179 = vunpack.c.l.b16 %v99
    %v180 = vunpack.c.l.b16 %v100
    %v181 = vunpack.c.l.b16 %v101
    %v182 = vunpack.c.l.b16 %v102
    %v183 = vunpack.c.l.b16 %v103
    %v184 = vunpack.c.l.b16 %v104
    %v185 = vunpack.c.l.b16 %v105
    %v186 = vunpack.c.l.b16 %v106
    %v187 = vunpack.c.l.b16 %v107
    %v188 = vunpack.c.l.b16 %v108
    %v189 = vunpack.c.l.b16 %v109
    %v190 = vunpack.c.l.b16 %v110
    %v191 = vunpack.c.l.b16 %v111
    %v192 = vunpack.c.l.b16 %v112
    %v193 = vunpack.c.l.b16 %v113
    %v194 = vunpack.c.l.b16 %v114
    %v195 = vpack.c.b16 %v180, %v179
    %v196 = vpack.c.b16 %v182, %v181
    %v197 = vpack.c.b16 %v184, %v183
    %v198 = vpack.c.b16 %v186, %v185
    %v199 = vpack.c.b16 %v188, %v187
    %v200 = vpack.c.b16 %v190, %v189
    %v201 = vpack.c.b16 %v192, %v191
    %v202 = vpack.c.b16 %v194, %v193
    %v227 = vunpack.c.l.b16 %v147
    %v228 = vunpack.c.l.b16 %v148
    %v229 = vunpack.c.l.b16 %v149
    %v230 = vunpack.c.l.b16 %v150
    %v231 = vunpack.c.l.b16 %v151
    %v232 = vunpack.c.l.b16 %v152
    %v233 = vunpack.c.l.b16 %v153
    %v234 = vunpack.c.l.b16 %v154
    %v235 = vunpack.c.l.b16 %v155
    %v236 = vunpack.c.l.b16 %v156
    %v237 = vunpack.c.l.b16 %v157
    %v238 = vunpack.c.l.b16 %v158
    %v239 = vunpack.c.l.b16 %v159
    %v240 = vunpack.c.l.b16 %v160
    %v241 = vunpack.c.l.b16 %v161
    %v242 = vunpack.c.l.b16 %v162
    %v243 = vpack.c.b16 %v228, %v227
    %v244 = vpack.c.b16 %v230, %v229
    %v245 = vpack.c.b16 %v232, %v231
    %v246 = vpack.c.b16 %v234, %v233
    %v247 = vpack.c.b16 %v236, %v235
    %v248 = vpack.c.b16 %v238, %v237
    %v249 = vpack.c.b16 %v240, %v239
    %v250 = vpack.c.b16 %v242, %v241
    %259 = vmatprep.subr.bf16.mxu0 0
    %260 = vmatpush1.bf16.msra.mxu0 %v243
    %261 = vmatprep.subr.bf16.mxu0 0
    %262 = vmatpush1.bf16.msra.mxu0 %v244
    %263 = vmatprep.subr.bf16.mxu0 0
    %264 = vmatpush1.bf16.msra.mxu0 %v245
    %265 = vmatprep.subr.bf16.mxu0 0
    %266 = vmatpush1.bf16.msra.mxu0 %v246
    %267 = vmatprep.subr.bf16.mxu0 0
    %268 = vmatpush1.bf16.msra.mxu0 %v247
    %269 = vmatprep.subr.bf16.mxu0 0
    %270 = vmatpush1.bf16.msra.mxu0 %v248
    %271 = vmatprep.subr.bf16.mxu0 0
    %272 = vmatpush1.bf16.msra.mxu0 %v249
    %273 = vmatprep.subr.bf16.mxu0 0
    %274 = vmatpush1.bf16.msra.mxu0 %v250
    %275 = vmatprep.subr.bf16.mxu0 0
    %276 = vmatpush1.bf16.msra.mxu0 0
    %277 = vmatprep.subr.bf16.mxu0 0
    %278 = vmatpush1.bf16.msra.mxu0 0
    %279 = vmatprep.subr.bf16.mxu0 0
    %280 = vmatpush1.bf16.msra.mxu0 0
    %281 = vmatprep.subr.bf16.mxu0 0
    %282 = vmatpush1.bf16.msra.mxu0 0
    %283 = vmatprep.subr.bf16.mxu0 0
    %284 = vmatpush1.bf16.msra.mxu0 0
    %285 = vmatprep.subr.bf16.mxu0 0
    %286 = vmatpush1.bf16.msra.mxu0 0
    %287 = vmatprep.subr.bf16.mxu0 0
    %288 = vmatpush1.bf16.msra.mxu0 0
    %289 = vmatprep.subr.bf16.mxu0 0
    %290 = vmatpush1.bf16.msra.mxu0 0
    %291 = vmatprep.mubr.bf16.mxu0 0
    %292 = vmatmul.mubr.bf16.gmra.mrb[0].mxu0 %v195
    %v293 = vpop.f32.mrb[0].mxu0
    %v294 = vadd.f32 0.0, %v293
    %v295 = vpop.f32.mrb[0].mxu0
    %v296 = vpop.f32.mrb[0].mxu0
    %v297 = vadd.f32 0.0, %v296
    %v298 = vpop.f32.mrb[0].mxu0
    %299 = vmatprep.mubr.bf16.mxu0 0
    %300 = vmatmul.mubr.bf16.gmra.mrb[0].mxu0 %v196
    %v301 = vpop.f32.mrb[0].mxu0
    %v302 = vadd.f32 0.0, %v301
    %v303 = vpop.f32.mrb[0].mxu0
    %v304 = vpop.f32.mrb[0].mxu0
    %v305 = vadd.f32 0.0, %v304
    %v306 = vpop.f32.mrb[0].mxu0
    %307 = vmatprep.mubr.bf16.mxu0 0
    %308 = vmatmul.mubr.bf16.gmra.mrb[0].mxu0 %v197
    %v309 = vpop.f32.mrb[0].mxu0
    %v310 = vadd.f32 0.0, %v309
    %v311 = vpop.f32.mrb[0].mxu0
    %v312 = vpop.f32.mrb[0].mxu0
    %v313 = vadd.f32 0.0, %v312
    %v314 = vpop.f32.mrb[0].mxu0
    %315 = vmatprep.mubr.bf16.mxu0 0
    %316 = vmatmul.mubr.bf16.gmra.mrb[0].mxu0 %v198
    %v317 = vpop.f32.mrb[0].mxu0
    %v318 = vadd.f32 0.0, %v317
    %v319 = vpop.f32.mrb[0].mxu0
    %v320 = vpop.f32.mrb[0].mxu0
    %v321 = vadd.f32 0.0, %v320
    %v322 = vpop.f32.mrb[0].mxu0
    %323 = vmatprep.mubr.bf16.mxu0 0
    %324 = vmatmul.mubr.bf16.gmra.mrb[0].mxu0 %v199
    %v325 = vpop.f32.mrb[0].mxu0
    %v326 = vadd.f32 0.0, %v325
    %v327 = vpop.f32.mrb[0].mxu0
    %v328 = vpop.f32.mrb[0].mxu0
    %v329 = vadd.f32 0.0, %v328
    %v330 = vpop.f32.mrb[0].mxu0
    %331 = vmatprep.mubr.bf16.mxu0 0
    %332 = vmatmul.mubr.bf16.gmra.mrb[0].mxu0 %v200
    %v333 = vpop.f32.mrb[0].mxu0
    %v334 = vadd.f32 0.0, %v333
    %v335 = vpop.f32.mrb[0].mxu0
    %v336 = vpop.f32.mrb[0].mxu0
    %v337 = vadd.f32 0.0, %v336
    %v338 = vpop.f32.mrb[0].mxu0
    %339 = vmatprep.mubr.bf16.mxu0 0
    %340 = vmatmul.mubr.bf16.gmra.mrb[0].mxu0 %v201
    %v341 = vpop.f32.mrb[0].mxu0
    %v342 = vadd.f32 0.0, %v341
    %v343 = vpop.f32.mrb[0].mxu0
    %v344 = vpop.f32.mrb[0].mxu0
    %v345 = vadd.f32 0.0, %v344
    %v346 = vpop.f32.mrb[0].mxu0
    %347 = vmatprep.mubr.bf16.mxu0 0
    %348 = vmatmul.mubr.bf16.gmra.mrb[0].mxu0 %v202
    %v349 = vpop.f32.mrb[0].mxu0
    %v350 = vadd.f32 0.0, %v349
    %v351 = vpop.f32.mrb[0].mxu0
    %v352 = vpop.f32.mrb[0].mxu0
    %v353 = vadd.f32 0.0, %v352
    %v354 = vpop.f32.mrb[0].mxu0
    %355 = vdwg.mxu0
    %v356 = vpack.c.bf16 %v297, %v294
    %v357 = vpack.c.bf16 %v305, %v302
    %v358 = vpack.c.bf16 %v313, %v310
    %v359 = vpack.c.bf16 %v321, %v318
    %v360 = vpack.c.bf16 %v329, %v326
    %v361 = vpack.c.bf16 %v337, %v334
    %v362 = vpack.c.bf16 %v345, %v342
    %v363 = vpack.c.bf16 %v353, %v350
    %364 = vst [vmem:[#allocation2] sm:$0xff] %v356
    %365 = vst [vmem:[#allocation2 + $0x8] sm:$0xff] %v357
    %366 = vst [vmem:[#allocation2 + $0x10] sm:$0xff] %v358
    %367 = vst [vmem:[#allocation2 + $0x18] sm:$0xff] %v359
    %368 = vst [vmem:[#allocation2 + $0x20] sm:$0xff] %v360
    %369 = vst [vmem:[#allocation2 + $0x28] sm:$0xff] %v361
    %370 = vst [vmem:[#allocation2 + $0x30] sm:$0xff] %v362
    %371 = vst [vmem:[#allocation2 + $0x38] sm:$0xff] %v363
    %s372 = scalar_lea.vmem [#allocation8], 64
    %v373 = vld [vmem:[%s372] sm:$0xf]
    %v374 = vld [vmem:[%s372 + $0x4] sm:$0xf]
    %v375 = vld [vmem:[%s372 + $0x8] sm:$0xf]
    %v376 = vld [vmem:[%s372 + $0xc] sm:$0xf]
    %v377 = vld [vmem:[%s372 + $0x10] sm:$0xf]
    %v378 = vld [vmem:[%s372 + $0x14] sm:$0xf]
    %v379 = vld [vmem:[%s372 + $0x18] sm:$0xf]
    %v380 = vld [vmem:[%s372 + $0x1c] sm:$0xf]
    %v381 = vld [vmem:[%s372 + $0x20] sm:$0xf]
    %v382 = vld [vmem:[%s372 + $0x24] sm:$0xf]
    %v383 = vld [vmem:[%s372 + $0x28] sm:$0xf]
    %v384 = vld [vmem:[%s372 + $0x2c] sm:$0xf]
    %v385 = vld [vmem:[%s372 + $0x30] sm:$0xf]
    %v386 = vld [vmem:[%s372 + $0x34] sm:$0xf]
    %v387 = vld [vmem:[%s372 + $0x38] sm:$0xf]
    %v388 = vld [vmem:[%s372 + $0x3c] sm:$0xf]
    %v405 = vunpack.c.l.b16 %v373
    %v406 = vunpack.c.l.b16 %v374
    %v407 = vunpack.c.l.b16 %v375
    %v408 = vunpack.c.l.b16 %v376
    %v409 = vunpack.c.l.b16 %v377
    %v410 = vunpack.c.l.b16 %v378
    %v411 = vunpack.c.l.b16 %v379
    %v412 = vunpack.c.l.b16 %v380
    %v413 = vunpack.c.l.b16 %v381
    %v414 = vunpack.c.l.b16 %v382
    %v415 = vunpack.c.l.b16 %v383
    %v416 = vunpack.c.l.b16 %v384
    %v417 = vunpack.c.l.b16 %v385
    %v418 = vunpack.c.l.b16 %v386
    %v419 = vunpack.c.l.b16 %v387
    %v420 = vunpack.c.l.b16 %v388
    %v421 = vpack.c.b16 %v406, %v405
    %v422 = vpack.c.b16 %v408, %v407
    %v423 = vpack.c.b16 %v410, %v409
    %v424 = vpack.c.b16 %v412, %v411
    %v425 = vpack.c.b16 %v414, %v413
    %v426 = vpack.c.b16 %v416, %v415
    %v427 = vpack.c.b16 %v418, %v417
    %v428 = vpack.c.b16 %v420, %v419
    %437 = vmatprep.subr.bf16.mxu0 0
    %438 = vmatpush1.bf16.msra.mxu0 %v421
    %439 = vmatprep.subr.bf16.mxu0 0
    %440 = vmatpush1.bf16.msra.mxu0 %v422
    %441 = vmatprep.subr.bf16.mxu0 0
    %442 = vmatpush1.bf16.msra.mxu0 %v423
    %443 = vmatprep.subr.bf16.mxu0 0
    %444 = vmatpush1.bf16.msra.mxu0 %v424
    %445 = vmatprep.subr.bf16.mxu0 0
    %446 = vmatpush1.bf16.msra.mxu0 %v425
    %447 = vmatprep.subr.bf16.mxu0 0
    %448 = vmatpush1.bf16.msra.mxu0 %v426
    %449 = vmatprep.subr.bf16.mxu0 0
    %450 = vmatpush1.bf16.msra.mxu0 %v427
    %451 = vmatprep.subr.bf16.mxu0 0
    %452 = vmatpush1.bf16.msra.mxu0 %v428
    %453 = vmatprep.subr.bf16.mxu0 0
    %454 = vmatpush1.bf16.msra.mxu0 0
    %455 = vmatprep.subr.bf16.mxu0 0
    %456 = vmatpush1.bf16.msra.mxu0 0
    %457 = vmatprep.subr.bf16.mxu0 0
    %458 = vmatpush1.bf16.msra.mxu0 0
    %459 = vmatprep.subr.bf16.mxu0 0
    %460 = vmatpush1.bf16.msra.mxu0 0
    %461 = vmatprep.subr.bf16.mxu0 0
    %462 = vmatpush1.bf16.msra.mxu0 0
    %463 = vmatprep.subr.bf16.mxu0 0
    %464 = vmatpush1.bf16.msra.mxu0 0
    %465 = vmatprep.subr.bf16.mxu0 0
    %466 = vmatpush1.bf16.msra.mxu0 0
    %467 = vmatprep.subr.bf16.mxu0 0
    %468 = vmatpush1.bf16.msra.mxu0 0
    %469 = vmatprep.mubr.bf16.mxu0 0
    %470 = vmatmul.mubr.bf16.gmra.mrb[0].mxu0 %v195
    %v471 = vpop.f32.mrb[0].mxu0
    %v472 = vadd.f32 0.0, %v471
    %v473 = vpop.f32.mrb[0].mxu0
    %v474 = vpop.f32.mrb[0].mxu0
    %v475 = vadd.f32 0.0, %v474
    %v476 = vpop.f32.mrb[0].mxu0
    %477 = vmatprep.mubr.bf16.mxu0 0
    %478 = vmatmul.mubr.bf16.gmra.mrb[0].mxu0 %v196
    %v479 = vpop.f32.mrb[0].mxu0
    %v480 = vadd.f32 0.0, %v479
    %v481 = vpop.f32.mrb[0].mxu0
    %v482 = vpop.f32.mrb[0].mxu0
    %v483 = vadd.f32 0.0, %v482
    %v484 = vpop.f32.mrb[0].mxu0
    %485 = vmatprep.mubr.bf16.mxu0 0
    %486 = vmatmul.mubr.bf16.gmra.mrb[0].mxu0 %v197
    %v487 = vpop.f32.mrb[0].mxu0
    %v488 = vadd.f32 0.0, %v487
    %v489 = vpop.f32.mrb[0].mxu0
    %v490 = vpop.f32.mrb[0].mxu0
    %v491 = vadd.f32 0.0, %v490
    %v492 = vpop.f32.mrb[0].mxu0
    %493 = vmatprep.mubr.bf16.mxu0 0
    %494 = vmatmul.mubr.bf16.gmra.mrb[0].mxu0 %v198
    %v495 = vpop.f32.mrb[0].mxu0
    %v496 = vadd.f32 0.0, %v495
    %v497 = vpop.f32.mrb[0].mxu0
    %v498 = vpop.f32.mrb[0].mxu0
    %v499 = vadd.f32 0.0, %v498
    %v500 = vpop.f32.mrb[0].mxu0
    %501 = vmatprep.mubr.bf16.mxu0 0
    %502 = vmatmul.mubr.bf16.gmra.mrb[0].mxu0 %v199
    %v503 = vpop.f32.mrb[0].mxu0
    %v504 = vadd.f32 0.0, %v503
    %v505 = vpop.f32.mrb[0].mxu0
    %v506 = vpop.f32.mrb[0].mxu0
    %v507 = vadd.f32 0.0, %v506
    %v508 = vpop.f32.mrb[0].mxu0
    %509 = vmatprep.mubr.bf16.mxu0 0
    %510 = vmatmul.mubr.bf16.gmra.mrb[0].mxu0 %v200
    %v511 = vpop.f32.mrb[0].mxu0
    %v512 = vadd.f32 0.0, %v511
    %v513 = vpop.f32.mrb[0].mxu0
    %v514 = vpop.f32.mrb[0].mxu0
    %v515 = vadd.f32 0.0, %v514
    %v516 = vpop.f32.mrb[0].mxu0
    %517 = vmatprep.mubr.bf16.mxu0 0
    %518 = vmatmul.mubr.bf16.gmra.mrb[0].mxu0 %v201
    %v519 = vpop.f32.mrb[0].mxu0
    %v520 = vadd.f32 0.0, %v519
    %v521 = vpop.f32.mrb[0].mxu0
    %v522 = vpop.f32.mrb[0].mxu0
    %v523 = vadd.f32 0.0, %v522
    %v524 = vpop.f32.mrb[0].mxu0
    %525 = vmatprep.mubr.bf16.mxu0 0
    %526 = vmatmul.mubr.bf16.gmra.mrb[0].mxu0 %v202
    %v527 = vpop.f32.mrb[0].mxu0
    %v528 = vadd.f32 0.0, %v527
    %v529 = vpop.f32.mrb[0].mxu0
    %v530 = vpop.f32.mrb[0].mxu0
    %v531 = vadd.f32 0.0, %v530
    %v532 = vpop.f32.mrb[0].mxu0
    %533 = vdwg.mxu0
    %v534 = vpack.c.bf16 %v475, %v472
    %v535 = vpack.c.bf16 %v483, %v480
    %v536 = vpack.c.bf16 %v491, %v488
    %v537 = vpack.c.bf16 %v499, %v496
    %v538 = vpack.c.bf16 %v507, %v504
    %v539 = vpack.c.bf16 %v515, %v512
    %v540 = vpack.c.bf16 %v523, %v520
    %v541 = vpack.c.bf16 %v531, %v528
    %542 = vst [vmem:[#allocation2 + $0x40] sm:$0xff] %v534
    %543 = vst [vmem:[#allocation2 + $0x48] sm:$0xff] %v535
    %544 = vst [vmem:[#allocation2 + $0x50] sm:$0xff] %v536
    %545 = vst [vmem:[#allocation2 + $0x58] sm:$0xff] %v537
    %546 = vst [vmem:[#allocation2 + $0x60] sm:$0xff] %v538
    %547 = vst [vmem:[#allocation2 + $0x68] sm:$0xff] %v539
    %548 = vst [vmem:[#allocation2 + $0x70] sm:$0xff] %v540
    %549 = vst [vmem:[#allocation2 + $0x78] sm:$0xff] %v541
    %s550 = scalar_lea.vmem [#allocation8], 128
    %v551 = vld [vmem:[%s550] sm:$0xf]
    %v552 = vld [vmem:[%s550 + $0x4] sm:$0xf]
    %v553 = vld [vmem:[%s550 + $0x8] sm:$0xf]
    %v554 = vld [vmem:[%s550 + $0xc] sm:$0xf]
    %v555 = vld [vmem:[%s550 + $0x10] sm:$0xf]
    %v556 = vld [vmem:[%s550 + $0x14] sm:$0xf]
    %v557 = vld [vmem:[%s550 + $0x18] sm:$0xf]
    %v558 = vld [vmem:[%s550 + $0x1c] sm:$0xf]
    %v559 = vld [vmem:[%s550 + $0x20] sm:$0xf]
    %v560 = vld [vmem:[%s550 + $0x24] sm:$0xf]
    %v561 = vld [vmem:[%s550 + $0x28] sm:$0xf]
    %v562 = vld [vmem:[%s550 + $0x2c] sm:$0xf]
    %v563 = vld [vmem:[%s550 + $0x30] sm:$0xf]
    %v564 = vld [vmem:[%s550 + $0x34] sm:$0xf]
    %v565 = vld [vmem:[%s550 + $0x38] sm:$0xf]
    %v566 = vld [vmem:[%s550 + $0x3c] sm:$0xf]
    %v583 = vunpack.c.l.b16 %v551
    %v584 = vunpack.c.l.b16 %v552
    %v585 = vunpack.c.l.b16 %v553
    %v586 = vunpack.c.l.b16 %v554
    %v587 = vunpack.c.l.b16 %v555
    %v588 = vunpack.c.l.b16 %v556
    %v589 = vunpack.c.l.b16 %v557
    %v590 = vunpack.c.l.b16 %v558
    %v591 = vunpack.c.l.b16 %v559
    %v592 = vunpack.c.l.b16 %v560
    %v593 = vunpack.c.l.b16 %v561
    %v594 = vunpack.c.l.b16 %v562
    %v595 = vunpack.c.l.b16 %v563
    %v596 = vunpack.c.l.b16 %v564
    %v597 = vunpack.c.l.b16 %v565
    %v598 = vunpack.c.l.b16 %v566
    %v599 = vpack.c.b16 %v584, %v583
    %v600 = vpack.c.b16 %v586, %v585
    %v601 = vpack.c.b16 %v588, %v587
    %v602 = vpack.c.b16 %v590, %v589
    %v603 = vpack.c.b16 %v592, %v591
    %v604 = vpack.c.b16 %v594, %v593
    %v605 = vpack.c.b16 %v596, %v595
    %v606 = vpack.c.b16 %v598, %v597
    %615 = vmatprep.subr.bf16.mxu0 0
    %616 = vmatpush1.bf16.msra.mxu0 %v599
    %617 = vmatprep.subr.bf16.mxu0 0
    %618 = vmatpush1.bf16.msra.mxu0 %v600
    %619 = vmatprep.subr.bf16.mxu0 0
    %620 = vmatpush1.bf16.msra.mxu0 %v601
    %621 = vmatprep.subr.bf16.mxu0 0
    %622 = vmatpush1.bf16.msra.mxu0 %v602
    %623 = vmatprep.subr.bf16.mxu0 0
    %624 = vmatpush1.bf16.msra.mxu0 %v603
    %625 = vmatprep.subr.bf16.mxu0 0
    %626 = vmatpush1.bf16.msra.mxu0 %v604
    %627 = vmatprep.subr.bf16.mxu0 0
    %628 = vmatpush1.bf16.msra.mxu0 %v605
    %629 = vmatprep.subr.bf16.mxu0 0
    %630 = vmatpush1.bf16.msra.mxu0 %v606
    %631 = vmatprep.subr.bf16.mxu0 0
    %632 = vmatpush1.bf16.msra.mxu0 0
    %633 = vmatprep.subr.bf16.mxu0 0
    %634 = vmatpush1.bf16.msra.mxu0 0
    %635 = vmatprep.subr.bf16.mxu0 0
    %636 = vmatpush1.bf16.msra.mxu0 0
    %637 = vmatprep.subr.bf16.mxu0 0
    %638 = vmatpush1.bf16.msra.mxu0 0
    %639 = vmatprep.subr.bf16.mxu0 0
    %640 = vmatpush1.bf16.msra.mxu0 0
    %641 = vmatprep.subr.bf16.mxu0 0
    %642 = vmatpush1.bf16.msra.mxu0 0
    %643 = vmatprep.subr.bf16.mxu0 0
    %644 = vmatpush1.bf16.msra.mxu0 0
    %645 = vmatprep.subr.bf16.mxu0 0
    %646 = vmatpush1.bf16.msra.mxu0 0
    %647 = vmatprep.mubr.bf16.mxu0 0
    %648 = vmatmul.mubr.bf16.gmra.mrb[0].mxu0 %v195
    %v649 = vpop.f32.mrb[0].mxu0
    %v650 = vadd.f32 0.0, %v649
    %v651 = vpop.f32.mrb[0].mxu0
    %v652 = vpop.f32.mrb[0].mxu0
    %v653 = vadd.f32 0.0, %v652
    %v654 = vpop.f32.mrb[0].mxu0
    %655 = vmatprep.mubr.bf16.mxu0 0
    %656 = vmatmul.mubr.bf16.gmra.mrb[0].mxu0 %v196
    %v657 = vpop.f32.mrb[0].mxu0
    %v658 = vadd.f32 0.0, %v657
    %v659 = vpop.f32.mrb[0].mxu0
    %v660 = vpop.f32.mrb[0].mxu0
    %v661 = vadd.f32 0.0, %v660
    %v662 = vpop.f32.mrb[0].mxu0
    %663 = vmatprep.mubr.bf16.mxu0 0
    %664 = vmatmul.mubr.bf16.gmra.mrb[0].mxu0 %v197
    %v665 = vpop.f32.mrb[0].mxu0
    %v666 = vadd.f32 0.0, %v665
    %v667 = vpop.f32.mrb[0].mxu0
    %v668 = vpop.f32.mrb[0].mxu0
    %v669 = vadd.f32 0.0, %v668
    %v670 = vpop.f32.mrb[0].mxu0
    %671 = vmatprep.mubr.bf16.mxu0 0
    %672 = vmatmul.mubr.bf16.gmra.mrb[0].mxu0 %v198
    %v673 = vpop.f32.mrb[0].mxu0
    %v674 = vadd.f32 0.0, %v673
    %v675 = vpop.f32.mrb[0].mxu0
    %v676 = vpop.f32.mrb[0].mxu0
    %v677 = vadd.f32 0.0, %v676
    %v678 = vpop.f32.mrb[0].mxu0
    %679 = vmatprep.mubr.bf16.mxu0 0
    %680 = vmatmul.mubr.bf16.gmra.mrb[0].mxu0 %v199
    %v681 = vpop.f32.mrb[0].mxu0
    %v682 = vadd.f32 0.0, %v681
    %v683 = vpop.f32.mrb[0].mxu0
    %v684 = vpop.f32.mrb[0].mxu0
    %v685 = vadd.f32 0.0, %v684
    %v686 = vpop.f32.mrb[0].mxu0
    %687 = vmatprep.mubr.bf16.mxu0 0
    %688 = vmatmul.mubr.bf16.gmra.mrb[0].mxu0 %v200
    %v689 = vpop.f32.mrb[0].mxu0
    %v690 = vadd.f32 0.0, %v689
    %v691 = vpop.f32.mrb[0].mxu0
    %v692 = vpop.f32.mrb[0].mxu0
    %v693 = vadd.f32 0.0, %v692
    %v694 = vpop.f32.mrb[0].mxu0
    %695 = vmatprep.mubr.bf16.mxu0 0
    %696 = vmatmul.mubr.bf16.gmra.mrb[0].mxu0 %v201
    %v697 = vpop.f32.mrb[0].mxu0
    %v698 = vadd.f32 0.0, %v697
    %v699 = vpop.f32.mrb[0].mxu0
    %v700 = vpop.f32.mrb[0].mxu0
    %v701 = vadd.f32 0.0, %v700
    %v702 = vpop.f32.mrb[0].mxu0
    %703 = vmatprep.mubr.bf16.mxu0 0
    %704 = vmatmul.mubr.bf16.gmra.mrb[0].mxu0 %v202
    %v705 = vpop.f32.mrb[0].mxu0
    %v706 = vadd.f32 0.0, %v705
    %v707 = vpop.f32.mrb[0].mxu0
    %v708 = vpop.f32.mrb[0].mxu0
    %v709 = vadd.f32 0.0, %v708
    %v710 = vpop.f32.mrb[0].mxu0
    %711 = vdwg.mxu0
    %v712 = vpack.c.bf16 %v653, %v650
    %v713 = vpack.c.bf16 %v661, %v658
    %v714 = vpack.c.bf16 %v669, %v666
    %v715 = vpack.c.bf16 %v677, %v674
    %v716 = vpack.c.bf16 %v685, %v682
    %v717 = vpack.c.bf16 %v693, %v690
    %v718 = vpack.c.bf16 %v701, %v698
    %v719 = vpack.c.bf16 %v709, %v706
    %720 = vst [vmem:[#allocation2 + $0x80] sm:$0xff] %v712
    %721 = vst [vmem:[#allocation2 + $0x88] sm:$0xff] %v713
    %722 = vst [vmem:[#allocation2 + $0x90] sm:$0xff] %v714
    %723 = vst [vmem:[#allocation2 + $0x98] sm:$0xff] %v715
    %724 = vst [vmem:[#allocation2 + $0xa0] sm:$0xff] %v716
    %725 = vst [vmem:[#allocation2 + $0xa8] sm:$0xff] %v717
    %726 = vst [vmem:[#allocation2 + $0xb0] sm:$0xff] %v718
    %727 = vst [vmem:[#allocation2 + $0xb8] sm:$0xff] %v719
    %v728 = vld [vmem:[#allocation9] sm:$0xf]
    %v729 = vld [vmem:[#allocation9 + $0x4] sm:$0xf]
    %v730 = vld [vmem:[#allocation9 + $0x8] sm:$0xf]
    %v731 = vld [vmem:[#allocation9 + $0xc] sm:$0xf]
    %v732 = vld [vmem:[#allocation9 + $0x10] sm:$0xf]
    %v733 = vld [vmem:[#allocation9 + $0x14] sm:$0xf]
    %v734 = vld [vmem:[#allocation9 + $0x18] sm:$0xf]
    %v735 = vld [vmem:[#allocation9 + $0x1c] sm:$0xf]
    %v736 = vld [vmem:[#allocation9 + $0x20] sm:$0xf]
    %v737 = vld [vmem:[#allocation9 + $0x24] sm:$0xf]
    %v738 = vld [vmem:[#allocation9 + $0x28] sm:$0xf]
    %v739 = vld [vmem:[#allocation9 + $0x2c] sm:$0xf]
    %v740 = vld [vmem:[#allocation9 + $0x30] sm:$0xf]
    %v741 = vld [vmem:[#allocation9 + $0x34] sm:$0xf]
    %v742 = vld [vmem:[#allocation9 + $0x38] sm:$0xf]
    %v743 = vld [vmem:[#allocation9 + $0x3c] sm:$0xf]
    %v744 = vld [vmem:[%s4] sm:$0x1]
    %v746 = vlaneseq
    %v747 = vshrl.u32 %v746, 7
    %v748 = vsub.s32 0, %v747
    %v749 = vrot.slane %v744, %v748
    %v767 = vunpack.c.l.b16 %v728
    %v768 = vunpack.c.l.b16 %v729
    %v769 = vunpack.c.l.b16 %v730
    %v770 = vunpack.c.l.b16 %v731
    %v771 = vunpack.c.l.b16 %v732
    %v772 = vunpack.c.l.b16 %v733
    %v773 = vunpack.c.l.b16 %v734
    %v774 = vunpack.c.l.b16 %v735
    %v775 = vunpack.c.l.b16 %v736
    %v776 = vunpack.c.l.b16 %v737
    %v777 = vunpack.c.l.b16 %v738
    %v778 = vunpack.c.l.b16 %v739
    %v779 = vunpack.c.l.b16 %v740
    %v780 = vunpack.c.l.b16 %v741
    %v781 = vunpack.c.l.b16 %v742
    %v782 = vunpack.c.l.b16 %v743
    %v783 = vpack.c.b16 %v768, %v767
    %v784 = vpack.c.b16 %v770, %v769
    %v785 = vpack.c.b16 %v772, %v771
    %v786 = vpack.c.b16 %v774, %v773
    %v787 = vpack.c.b16 %v776, %v775
    %v788 = vpack.c.b16 %v778, %v777
    %v789 = vpack.c.b16 %v780, %v779
    %v790 = vpack.c.b16 %v782, %v781
    %799 = vmatprep.subr.bf16.mxu0 0
    %800 = vmatpush1.bf16.msra.mxu0 %v783
    %801 = vmatprep.subr.bf16.mxu0 0
    %802 = vmatpush1.bf16.msra.mxu0 %v784
    %803 = vmatprep.subr.bf16.mxu0 0
    %804 = vmatpush1.bf16.msra.mxu0 %v785
    %805 = vmatprep.subr.bf16.mxu0 0
    %806 = vmatpush1.bf16.msra.mxu0 %v786
    %807 = vmatprep.subr.bf16.mxu0 0
    %808 = vmatpush1.bf16.msra.mxu0 %v787
    %809 = vmatprep.subr.bf16.mxu0 0
    %810 = vmatpush1.bf16.msra.mxu0 %v788
    %811 = vmatprep.subr.bf16.mxu0 0
    %812 = vmatpush1.bf16.msra.mxu0 %v789
    %813 = vmatprep.subr.bf16.mxu0 0
    %814 = vmatpush1.bf16.msra.mxu0 %v790
    %815 = vmatprep.subr.bf16.mxu0 0
    %816 = vmatpush1.bf16.msra.mxu0 0
    %817 = vmatprep.subr.bf16.mxu0 0
    %818 = vmatpush1.bf16.msra.mxu0 0
    %819 = vmatprep.subr.bf16.mxu0 0
    %820 = vmatpush1.bf16.msra.mxu0 0
    %821 = vmatprep.subr.bf16.mxu0 0
    %822 = vmatpush1.bf16.msra.mxu0 0
    %823 = vmatprep.subr.bf16.mxu0 0
    %824 = vmatpush1.bf16.msra.mxu0 0
    %825 = vmatprep.subr.bf16.mxu0 0
    %826 = vmatpush1.bf16.msra.mxu0 0
    %827 = vmatprep.subr.bf16.mxu0 0
    %828 = vmatpush1.bf16.msra.mxu0 0
    %829 = vmatprep.subr.bf16.mxu0 0
    %830 = vmatpush1.bf16.msra.mxu0 0
    %831 = vmatprep.mubr.bf16.mxu0 0
    %832 = vmatmul.mubr.bf16.gmra.mrb[0].mxu0 %v195
    %v833 = vpop.f32.mrb[0].mxu0
    %v834 = vadd.f32 %v749, %v833
    %v835 = vpop.f32.mrb[0].mxu0
    %v836 = vpop.f32.mrb[0].mxu0
    %v837 = vadd.f32 %v749, %v836
    %v838 = vpop.f32.mrb[0].mxu0
    %839 = vmatprep.mubr.bf16.mxu0 0
    %840 = vmatmul.mubr.bf16.gmra.mrb[0].mxu0 %v196
    %v841 = vpop.f32.mrb[0].mxu0
    %v842 = vadd.f32 %v749, %v841
    %v843 = vpop.f32.mrb[0].mxu0
    %v844 = vpop.f32.mrb[0].mxu0
    %v845 = vadd.f32 %v749, %v844
    %v846 = vpop.f32.mrb[0].mxu0
    %847 = vmatprep.mubr.bf16.mxu0 0
    %848 = vmatmul.mubr.bf16.gmra.mrb[0].mxu0 %v197
    %v849 = vpop.f32.mrb[0].mxu0
    %v850 = vadd.f32 %v749, %v849
    %v851 = vpop.f32.mrb[0].mxu0
    %v852 = vpop.f32.mrb[0].mxu0
    %v853 = vadd.f32 %v749, %v852
    %v854 = vpop.f32.mrb[0].mxu0
    %855 = vmatprep.mubr.bf16.mxu0 0
    %856 = vmatmul.mubr.bf16.gmra.mrb[0].mxu0 %v198
    %v857 = vpop.f32.mrb[0].mxu0
    %v858 = vadd.f32 %v749, %v857
    %v859 = vpop.f32.mrb[0].mxu0
    %v860 = vpop.f32.mrb[0].mxu0
    %v861 = vadd.f32 %v749, %v860
    %v862 = vpop.f32.mrb[0].mxu0
    %863 = vmatprep.mubr.bf16.mxu0 0
    %864 = vmatmul.mubr.bf16.gmra.mrb[0].mxu0 %v199
    %v865 = vpop.f32.mrb[0].mxu0
    %v866 = vadd.f32 %v749, %v865
    %v867 = vpop.f32.mrb[0].mxu0
    %v868 = vpop.f32.mrb[0].mxu0
    %v869 = vadd.f32 %v749, %v868
    %v870 = vpop.f32.mrb[0].mxu0
    %871 = vmatprep.mubr.bf16.mxu0 0
    %872 = vmatmul.mubr.bf16.gmra.mrb[0].mxu0 %v200
    %v873 = vpop.f32.mrb[0].mxu0
    %v874 = vadd.f32 %v749, %v873
    %v875 = vpop.f32.mrb[0].mxu0
    %v876 = vpop.f32.mrb[0].mxu0
    %v877 = vadd.f32 %v749, %v876
    %v878 = vpop.f32.mrb[0].mxu0
    %879 = vmatprep.mubr.bf16.mxu0 0
    %880 = vmatmul.mubr.bf16.gmra.mrb[0].mxu0 %v201
    %v881 = vpop.f32.mrb[0].mxu0
    %v882 = vadd.f32 %v749, %v881
    %v883 = vpop.f32.mrb[0].mxu0
    %v884 = vpop.f32.mrb[0].mxu0
    %v885 = vadd.f32 %v749, %v884
    %v886 = vpop.f32.mrb[0].mxu0
    %887 = vmatprep.mubr.bf16.mxu0 0
    %888 = vmatmul.mubr.bf16.gmra.mrb[0].mxu0 %v202
    %v889 = vpop.f32.mrb[0].mxu0
    %v890 = vadd.f32 %v749, %v889
    %v891 = vpop.f32.mrb[0].mxu0
    %v892 = vpop.f32.mrb[0].mxu0
    %v893 = vadd.f32 %v749, %v892
    %v894 = vpop.f32.mrb[0].mxu0
    %895 = vdwg.mxu0
    %v896 = vld [vmem:[#allocation2] sm:$0xff]
    %v897 = vld [vmem:[#allocation2 + $0x8] sm:$0xff]
    %v898 = vld [vmem:[#allocation2 + $0x10] sm:$0xff]
    %v899 = vld [vmem:[#allocation2 + $0x18] sm:$0xff]
    %v900 = vld [vmem:[#allocation2 + $0x20] sm:$0xff]
    %v901 = vld [vmem:[#allocation2 + $0x28] sm:$0xff]
    %v902 = vld [vmem:[#allocation2 + $0x30] sm:$0xff]
    %v903 = vld [vmem:[#allocation2 + $0x38] sm:$0xff]
    %v904 = vld [vmem:[#allocation2 + $0x40] sm:$0xff]
    %v905 = vld [vmem:[#allocation2 + $0x48] sm:$0xff]
    %v906 = vld [vmem:[#allocation2 + $0x50] sm:$0xff]
    %v907 = vld [vmem:[#allocation2 + $0x58] sm:$0xff]
    %v908 = vld [vmem:[#allocation2 + $0x60] sm:$0xff]
    %v909 = vld [vmem:[#allocation2 + $0x68] sm:$0xff]
    %v910 = vld [vmem:[#allocation2 + $0x70] sm:$0xff]
    %v911 = vld [vmem:[#allocation2 + $0x78] sm:$0xff]
    %v912 = vld [vmem:[#allocation2 + $0x80] sm:$0xff]
    %v913 = vld [vmem:[#allocation2 + $0x88] sm:$0xff]
    %v914 = vld [vmem:[#allocation2 + $0x90] sm:$0xff]
    %v915 = vld [vmem:[#allocation2 + $0x98] sm:$0xff]
    %v916 = vld [vmem:[#allocation2 + $0xa0] sm:$0xff]
    %v917 = vld [vmem:[#allocation2 + $0xa8] sm:$0xff]
    %v918 = vld [vmem:[#allocation2 + $0xb0] sm:$0xff]
    %v919 = vld [vmem:[#allocation2 + $0xb8] sm:$0xff]
    %v952 = vunpack.c.l.b16 %v115
    %v953 = vunpack.c.h.b16 %v115
    %v954 = vunpack.c.l.b16 %v116
    %v955 = vunpack.c.l.b16 %v117
    %v956 = vunpack.c.h.b16 %v117
    %v957 = vunpack.c.l.b16 %v118
    %v958 = vunpack.c.l.b16 %v119
    %v959 = vunpack.c.h.b16 %v119
    %v960 = vunpack.c.l.b16 %v120
    %v961 = vunpack.c.l.b16 %v121
    %v962 = vunpack.c.h.b16 %v121
    %v963 = vunpack.c.l.b16 %v122
    %v964 = vunpack.c.l.b16 %v123
    %v965 = vunpack.c.h.b16 %v123
    %v966 = vunpack.c.l.b16 %v124
    %v967 = vunpack.c.l.b16 %v125
    %v968 = vunpack.c.h.b16 %v125
    %v969 = vunpack.c.l.b16 %v126
    %v970 = vunpack.c.l.b16 %v127
    %v971 = vunpack.c.h.b16 %v127
    %v972 = vunpack.c.l.b16 %v128
    %v973 = vunpack.c.l.b16 %v129
    %v974 = vunpack.c.h.b16 %v129
    %v975 = vunpack.c.l.b16 %v130
    %v976 = vunpack.c.l.b16 %v131
    %v977 = vunpack.c.h.b16 %v131
    %v978 = vunpack.c.l.b16 %v132
    %v979 = vunpack.c.l.b16 %v133
    %v980 = vunpack.c.h.b16 %v133
    %v981 = vunpack.c.l.b16 %v134
    %v982 = vunpack.c.l.b16 %v135
    %v983 = vunpack.c.h.b16 %v135
    %v984 = vunpack.c.l.b16 %v136
    %v985 = vunpack.c.l.b16 %v137
    %v986 = vunpack.c.h.b16 %v137
    %v987 = vunpack.c.l.b16 %v138
    %v988 = vunpack.c.l.b16 %v139
    %v989 = vunpack.c.h.b16 %v139
    %v990 = vunpack.c.l.b16 %v140
    %v991 = vunpack.c.l.b16 %v141
    %v992 = vunpack.c.h.b16 %v141
    %v993 = vunpack.c.l.b16 %v142
    %v994 = vunpack.c.l.b16 %v143
    %v995 = vunpack.c.h.b16 %v143
    %v996 = vunpack.c.l.b16 %v144
    %v997 = vunpack.c.l.b16 %v145
    %v998 = vunpack.c.h.b16 %v145
    %v999 = vunpack.c.l.b16 %v146
    %v1000 = vpack.c.b16 %v955, %v952
    %v1001 = vpack.c.b16 %v956, %v953
    %v1002 = vpack.c.b16 %v957, %v954
    %v1003 = vpack.c.b16 %v961, %v958
    %v1004 = vpack.c.b16 %v962, %v959
    %v1005 = vpack.c.b16 %v963, %v960
    %v1006 = vpack.c.b16 %v967, %v964
    %v1007 = vpack.c.b16 %v968, %v965
    %v1008 = vpack.c.b16 %v969, %v966
    %v1009 = vpack.c.b16 %v973, %v970
    %v1010 = vpack.c.b16 %v974, %v971
    %v1011 = vpack.c.b16 %v975, %v972
    %v1012 = vpack.c.b16 %v979, %v976
    %v1013 = vpack.c.b16 %v980, %v977
    %v1014 = vpack.c.b16 %v981, %v978
    %v1015 = vpack.c.b16 %v985, %v982
    %v1016 = vpack.c.b16 %v986, %v983
    %v1017 = vpack.c.b16 %v987, %v984
    %v1018 = vpack.c.b16 %v991, %v988
    %v1019 = vpack.c.b16 %v992, %v989
    %v1020 = vpack.c.b16 %v993, %v990
    %v1021 = vpack.c.b16 %v997, %v994
    %v1022 = vpack.c.b16 %v998, %v995
    %v1023 = vpack.c.b16 %v999, %v996
    %1048 = vmatprep.subr.bf16.mxu0 0
    %1049 = vmatpush1.bf16.msra.mxu0 %v896
    %1050 = vmatprep.subr.bf16.mxu0 0
    %1051 = vmatpush1.bf16.msra.mxu0 %v897
    %1052 = vmatprep.subr.bf16.mxu0 0
    %1053 = vmatpush1.bf16.msra.mxu0 %v898
    %1054 = vmatprep.subr.bf16.mxu0 0
    %1055 = vmatpush1.bf16.msra.mxu0 %v899
    %1056 = vmatprep.subr.bf16.mxu0 0
    %1057 = vmatpush1.bf16.msra.mxu0 %v900
    %1058 = vmatprep.subr.bf16.mxu0 0
    %1059 = vmatpush1.bf16.msra.mxu0 %v901
    %1060 = vmatprep.subr.bf16.mxu0 0
    %1061 = vmatpush1.bf16.msra.mxu0 %v902
    %1062 = vmatprep.subr.bf16.mxu0 0
    %1063 = vmatpush1.bf16.msra.mxu0 %v903
    %1064 = vmatprep.subr.bf16.mxu0 0
    %1065 = vmatpush1.bf16.msra.mxu0 %v904
    %1066 = vmatprep.subr.bf16.mxu0 0
    %1067 = vmatpush1.bf16.msra.mxu0 %v905
    %1068 = vmatprep.subr.bf16.mxu0 0
    %1069 = vmatpush1.bf16.msra.mxu0 %v906
    %1070 = vmatprep.subr.bf16.mxu0 0
    %1071 = vmatpush1.bf16.msra.mxu0 %v907
    %1072 = vmatprep.subr.bf16.mxu0 0
    %1073 = vmatpush1.bf16.msra.mxu0 %v908
    %1074 = vmatprep.subr.bf16.mxu0 0
    %1075 = vmatpush1.bf16.msra.mxu0 %v909
    %1076 = vmatprep.subr.bf16.mxu0 0
    %1077 = vmatpush1.bf16.msra.mxu0 %v910
    %1078 = vmatprep.subr.bf16.mxu0 0
    %1079 = vmatpush1.bf16.msra.mxu0 %v911
    %1080 = vmatprep.mubr.bf16.mxu0 %v1001
    %1081 = vmatmul.mubr.bf16.gmra.mrb[0].mxu0 %v1000
    %v1082 = vpop.f32.mrb[0].mxu0
    %v1083 = vadd.f32 0.0, %v1082
    %v1084 = vpop.f32.mrb[0].mxu0
    %v1085 = vpop.f32.mrb[0].mxu0
    %v1086 = vadd.f32 0.0, %v1085
    %v1087 = vpop.f32.mrb[0].mxu0
    %1088 = vmatprep.mubr.bf16.mxu0 %v1004
    %1089 = vmatmul.mubr.bf16.gmra.mrb[0].mxu0 %v1003
    %v1090 = vpop.f32.mrb[0].mxu0
    %v1091 = vadd.f32 0.0, %v1090
    %v1092 = vpop.f32.mrb[0].mxu0
    %v1093 = vpop.f32.mrb[0].mxu0
    %v1094 = vadd.f32 0.0, %v1093
    %v1095 = vpop.f32.mrb[0].mxu0
    %1096 = vmatprep.mubr.bf16.mxu0 %v1007
    %1097 = vmatmul.mubr.bf16.gmra.mrb[0].mxu0 %v1006
    %v1098 = vpop.f32.mrb[0].mxu0
    %v1099 = vadd.f32 0.0, %v1098
    %v1100 = vpop.f32.mrb[0].mxu0
    %v1101 = vpop.f32.mrb[0].mxu0
    %v1102 = vadd.f32 0.0, %v1101
    %v1103 = vpop.f32.mrb[0].mxu0
    %1104 = vmatprep.mubr.bf16.mxu0 %v1010
    %1105 = vmatmul.mubr.bf16.gmra.mrb[0].mxu0 %v1009
    %v1106 = vpop.f32.mrb[0].mxu0
    %v1107 = vadd.f32 0.0, %v1106
    %v1108 = vpop.f32.mrb[0].mxu0
    %v1109 = vpop.f32.mrb[0].mxu0
    %v1110 = vadd.f32 0.0, %v1109
    %v1111 = vpop.f32.mrb[0].mxu0
    %1112 = vmatprep.mubr.bf16.mxu0 %v1013
    %1113 = vmatmul.mubr.bf16.gmra.mrb[0].mxu0 %v1012
    %v1114 = vpop.f32.mrb[0].mxu0
    %v1115 = vadd.f32 0.0, %v1114
    %v1116 = vpop.f32.mrb[0].mxu0
    %v1117 = vpop.f32.mrb[0].mxu0
    %v1118 = vadd.f32 0.0, %v1117
    %v1119 = vpop.f32.mrb[0].mxu0
    %1120 = vmatprep.mubr.bf16.mxu0 %v1016
    %1121 = vmatmul.mubr.bf16.gmra.mrb[0].mxu0 %v1015
    %v1122 = vpop.f32.mrb[0].mxu0
    %v1123 = vadd.f32 0.0, %v1122
    %v1124 = vpop.f32.mrb[0].mxu0
    %v1125 = vpop.f32.mrb[0].mxu0
    %v1126 = vadd.f32 0.0, %v1125
    %v1127 = vpop.f32.mrb[0].mxu0
    %1128 = vmatprep.mubr.bf16.mxu0 %v1019
    %1129 = vmatmul.mubr.bf16.gmra.mrb[0].mxu0 %v1018
    %v1130 = vpop.f32.mrb[0].mxu0
    %v1131 = vadd.f32 0.0, %v1130
    %v1132 = vpop.f32.mrb[0].mxu0
    %v1133 = vpop.f32.mrb[0].mxu0
    %v1134 = vadd.f32 0.0, %v1133
    %v1135 = vpop.f32.mrb[0].mxu0
    %1136 = vmatprep.mubr.bf16.mxu0 %v1022
    %1137 = vmatmul.mubr.bf16.gmra.mrb[0].mxu0 %v1021
    %v1138 = vpop.f32.mrb[0].mxu0
    %v1139 = vadd.f32 0.0, %v1138
    %v1140 = vpop.f32.mrb[0].mxu0
    %v1141 = vpop.f32.mrb[0].mxu0
    %v1142 = vadd.f32 0.0, %v1141
    %v1143 = vpop.f32.mrb[0].mxu0
    %1144 = vdwg.mxu0
    %1145 = vmatprep.subr.bf16.mxu0 0
    %1146 = vmatpush1.bf16.msra.mxu0 %v912
    %1147 = vmatprep.subr.bf16.mxu0 0
    %1148 = vmatpush1.bf16.msra.mxu0 %v913
    %1149 = vmatprep.subr.bf16.mxu0 0
    %1150 = vmatpush1.bf16.msra.mxu0 %v914
    %1151 = vmatprep.subr.bf16.mxu0 0
    %1152 = vmatpush1.bf16.msra.mxu0 %v915
    %1153 = vmatprep.subr.bf16.mxu0 0
    %1154 = vmatpush1.bf16.msra.mxu0 %v916
    %1155 = vmatprep.subr.bf16.mxu0 0
    %1156 = vmatpush1.bf16.msra.mxu0 %v917
    %1157 = vmatprep.subr.bf16.mxu0 0
    %1158 = vmatpush1.bf16.msra.mxu0 %v918
    %1159 = vmatprep.subr.bf16.mxu0 0
    %1160 = vmatpush1.bf16.msra.mxu0 %v919
    %1161 = vmatprep.subr.bf16.mxu0 0
    %1162 = vmatpush1.bf16.msra.mxu0 0
    %1163 = vmatprep.subr.bf16.mxu0 0
    %1164 = vmatpush1.bf16.msra.mxu0 0
    %1165 = vmatprep.subr.bf16.mxu0 0
    %1166 = vmatpush1.bf16.msra.mxu0 0
    %1167 = vmatprep.subr.bf16.mxu0 0
    %1168 = vmatpush1.bf16.msra.mxu0 0
    %1169 = vmatprep.subr.bf16.mxu0 0
    %1170 = vmatpush1.bf16.msra.mxu0 0
    %1171 = vmatprep.subr.bf16.mxu0 0
    %1172 = vmatpush1.bf16.msra.mxu0 0
    %1173 = vmatprep.subr.bf16.mxu0 0
    %1174 = vmatpush1.bf16.msra.mxu0 0
    %1175 = vmatprep.subr.bf16.mxu0 0
    %1176 = vmatpush1.bf16.msra.mxu0 0
    %1177 = vmatprep.mubr.bf16.mxu0 0
    %1178 = vmatmul.mubr.bf16.gmra.mrb[0].mxu0 %v1002
    %v1179 = vpop.f32.mrb[0].mxu0
    %v1180 = vadd.f32 %v1083, %v1179
    %v1181 = vpop.f32.mrb[0].mxu0
    %v1182 = vpop.f32.mrb[0].mxu0
    %v1183 = vadd.f32 %v1086, %v1182
    %v1184 = vpop.f32.mrb[0].mxu0
    %1185 = vmatprep.mubr.bf16.mxu0 0
    %1186 = vmatmul.mubr.bf16.gmra.mrb[0].mxu0 %v1005
    %v1187 = vpop.f32.mrb[0].mxu0
    %v1188 = vadd.f32 %v1091, %v1187
    %v1189 = vpop.f32.mrb[0].mxu0
    %v1190 = vpop.f32.mrb[0].mxu0
    %v1191 = vadd.f32 %v1094, %v1190
    %v1192 = vpop.f32.mrb[0].mxu0
    %1193 = vmatprep.mubr.bf16.mxu0 0
    %1194 = vmatmul.mubr.bf16.gmra.mrb[0].mxu0 %v1008
    %v1195 = vpop.f32.mrb[0].mxu0
    %v1196 = vadd.f32 %v1099, %v1195
    %v1197 = vpop.f32.mrb[0].mxu0
    %v1198 = vpop.f32.mrb[0].mxu0
    %v1199 = vadd.f32 %v1102, %v1198
    %v1200 = vpop.f32.mrb[0].mxu0
    %1201 = vmatprep.mubr.bf16.mxu0 0
    %1202 = vmatmul.mubr.bf16.gmra.mrb[0].mxu0 %v1011
    %v1203 = vpop.f32.mrb[0].mxu0
    %v1204 = vadd.f32 %v1107, %v1203
    %v1205 = vpop.f32.mrb[0].mxu0
    %v1206 = vpop.f32.mrb[0].mxu0
    %v1207 = vadd.f32 %v1110, %v1206
    %v1208 = vpop.f32.mrb[0].mxu0
    %1209 = vmatprep.mubr.bf16.mxu0 0
    %1210 = vmatmul.mubr.bf16.gmra.mrb[0].mxu0 %v1014
    %v1211 = vpop.f32.mrb[0].mxu0
    %v1212 = vadd.f32 %v1115, %v1211
    %v1213 = vpop.f32.mrb[0].mxu0
    %v1214 = vpop.f32.mrb[0].mxu0
    %v1215 = vadd.f32 %v1118, %v1214
    %v1216 = vpop.f32.mrb[0].mxu0
    %1217 = vmatprep.mubr.bf16.mxu0 0
    %1218 = vmatmul.mubr.bf16.gmra.mrb[0].mxu0 %v1017
    %v1219 = vpop.f32.mrb[0].mxu0
    %v1220 = vadd.f32 %v1123, %v1219
    %v1221 = vpop.f32.mrb[0].mxu0
    %v1222 = vpop.f32.mrb[0].mxu0
    %v1223 = vadd.f32 %v1126, %v1222
    %v1224 = vpop.f32.mrb[0].mxu0
    %1225 = vmatprep.mubr.bf16.mxu0 0
    %1226 = vmatmul.mubr.bf16.gmra.mrb[0].mxu0 %v1020
    %v1227 = vpop.f32.mrb[0].mxu0
    %v1228 = vadd.f32 %v1131, %v1227
    %v1229 = vpop.f32.mrb[0].mxu0
    %v1230 = vpop.f32.mrb[0].mxu0
    %v1231 = vadd.f32 %v1134, %v1230
    %v1232 = vpop.f32.mrb[0].mxu0
    %1233 = vmatprep.mubr.bf16.mxu0 0
    %1234 = vmatmul.mubr.bf16.gmra.mrb[0].mxu0 %v1023
    %v1235 = vpop.f32.mrb[0].mxu0
    %v1236 = vadd.f32 %v1139, %v1235
    %v1237 = vpop.f32.mrb[0].mxu0
    %v1238 = vpop.f32.mrb[0].mxu0
    %v1239 = vadd.f32 %v1142, %v1238
    %v1240 = vpop.f32.mrb[0].mxu0
    %1241 = vdwg.mxu0
    %v1242 = vadd.f32 %v834, %v1180
    %v1243 = vadd.f32 %v837, %v1183
    %v1244 = vadd.f32 %v842, %v1188
    %v1245 = vadd.f32 %v845, %v1191
    %v1246 = vadd.f32 %v850, %v1196
    %v1247 = vadd.f32 %v853, %v1199
    %v1248 = vadd.f32 %v858, %v1204
    %v1249 = vadd.f32 %v861, %v1207
    %v1250 = vadd.f32 %v866, %v1212
    %v1251 = vadd.f32 %v869, %v1215
    %v1252 = vadd.f32 %v874, %v1220
    %v1253 = vadd.f32 %v877, %v1223
    %v1254 = vadd.f32 %v882, %v1228
    %v1255 = vadd.f32 %v885, %v1231
    %v1256 = vadd.f32 %v890, %v1236
    %v1257 = vadd.f32 %v893, %v1239
    %v1258 = vmax.f32 %v1242, 0.0
    %v1259 = vmax.f32 %v1243, 0.0
    %v1260 = vmax.f32 %v1244, 0.0
    %v1261 = vmax.f32 %v1245, 0.0
    %v1262 = vmax.f32 %v1246, 0.0
    %v1263 = vmax.f32 %v1247, 0.0
    %v1264 = vmax.f32 %v1248, 0.0
    %v1265 = vmax.f32 %v1249, 0.0
    %v1266 = vmax.f32 %v1250, 0.0
    %v1267 = vmax.f32 %v1251, 0.0
    %v1268 = vmax.f32 %v1252, 0.0
    %v1269 = vmax.f32 %v1253, 0.0
    %v1270 = vmax.f32 %v1254, 0.0
    %v1271 = vmax.f32 %v1255, 0.0
    %v1272 = vmax.f32 %v1256, 0.0
    %v1273 = vmax.f32 %v1257, 0.0
    %v1274 = vpack.c.bf16 %v1259, %v1258
    %v1275 = vpack.c.bf16 %v1261, %v1260
    %v1276 = vpack.c.bf16 %v1263, %v1262
    %v1277 = vpack.c.bf16 %v1265, %v1264
    %v1278 = vpack.c.bf16 %v1267, %v1266
    %v1279 = vpack.c.bf16 %v1269, %v1268
    %v1280 = vpack.c.bf16 %v1271, %v1270
    %v1281 = vpack.c.bf16 %v1273, %v1272
    %s1282 = scalar_lea.vmem [#allocation8], 192
    %v1283 = vld [vmem:[%s1282] sm:$0xf]
    %v1284 = vld [vmem:[%s1282 + $0x4] sm:$0xf]
    %v1285 = vld [vmem:[%s1282 + $0x8] sm:$0xf]
    %v1286 = vld [vmem:[%s1282 + $0xc] sm:$0xf]
    %v1287 = vld [vmem:[%s1282 + $0x10] sm:$0xf]
    %v1288 = vld [vmem:[%s1282 + $0x14] sm:$0xf]
    %v1289 = vld [vmem:[%s1282 + $0x18] sm:$0xf]
    %v1290 = vld [vmem:[%s1282 + $0x1c] sm:$0xf]
    %v1291 = vld [vmem:[%s1282 + $0x20] sm:$0xf]
    %v1292 = vld [vmem:[%s1282 + $0x24] sm:$0xf]
    %v1293 = vld [vmem:[%s1282 + $0x28] sm:$0xf]
    %v1294 = vld [vmem:[%s1282 + $0x2c] sm:$0xf]
    %v1295 = vld [vmem:[%s1282 + $0x30] sm:$0xf]
    %v1296 = vld [vmem:[%s1282 + $0x34] sm:$0xf]
    %v1297 = vld [vmem:[%s1282 + $0x38] sm:$0xf]
    %v1298 = vld [vmem:[%s1282 + $0x3c] sm:$0xf]
    %v1315 = vunpack.c.l.b16 %v1283
    %v1316 = vunpack.c.l.b16 %v1284
    %v1317 = vunpack.c.l.b16 %v1285
    %v1318 = vunpack.c.l.b16 %v1286
    %v1319 = vunpack.c.l.b16 %v1287
    %v1320 = vunpack.c.l.b16 %v1288
    %v1321 = vunpack.c.l.b16 %v1289
    %v1322 = vunpack.c.l.b16 %v1290
    %v1323 = vunpack.c.l.b16 %v1291
    %v1324 = vunpack.c.l.b16 %v1292
    %v1325 = vunpack.c.l.b16 %v1293
    %v1326 = vunpack.c.l.b16 %v1294
    %v1327 = vunpack.c.l.b16 %v1295
    %v1328 = vunpack.c.l.b16 %v1296
    %v1329 = vunpack.c.l.b16 %v1297
    %v1330 = vunpack.c.l.b16 %v1298
    %v1331 = vpack.c.b16 %v1316, %v1315
    %v1332 = vpack.c.b16 %v1318, %v1317
    %v1333 = vpack.c.b16 %v1320, %v1319
    %v1334 = vpack.c.b16 %v1322, %v1321
    %v1335 = vpack.c.b16 %v1324, %v1323
    %v1336 = vpack.c.b16 %v1326, %v1325
    %v1337 = vpack.c.b16 %v1328, %v1327
    %v1338 = vpack.c.b16 %v1330, %v1329
    %1347 = vmatprep.subr.bf16.mxu0 0
    %1348 = vmatpush1.bf16.msra.mxu0 %v1331
    %1349 = vmatprep.subr.bf16.mxu0 0
    %1350 = vmatpush1.bf16.msra.mxu0 %v1332
    %1351 = vmatprep.subr.bf16.mxu0 0
    %1352 = vmatpush1.bf16.msra.mxu0 %v1333
    %1353 = vmatprep.subr.bf16.mxu0 0
    %1354 = vmatpush1.bf16.msra.mxu0 %v1334
    %1355 = vmatprep.subr.bf16.mxu0 0
    %1356 = vmatpush1.bf16.msra.mxu0 %v1335
    %1357 = vmatprep.subr.bf16.mxu0 0
    %1358 = vmatpush1.bf16.msra.mxu0 %v1336
    %1359 = vmatprep.subr.bf16.mxu0 0
    %1360 = vmatpush1.bf16.msra.mxu0 %v1337
    %1361 = vmatprep.subr.bf16.mxu0 0
    %1362 = vmatpush1.bf16.msra.mxu0 %v1338
    %1363 = vmatprep.subr.bf16.mxu0 0
    %1364 = vmatpush1.bf16.msra.mxu0 0
    %1365 = vmatprep.subr.bf16.mxu0 0
    %1366 = vmatpush1.bf16.msra.mxu0 0
    %1367 = vmatprep.subr.bf16.mxu0 0
    %1368 = vmatpush1.bf16.msra.mxu0 0
    %1369 = vmatprep.subr.bf16.mxu0 0
    %1370 = vmatpush1.bf16.msra.mxu0 0
    %1371 = vmatprep.subr.bf16.mxu0 0
    %1372 = vmatpush1.bf16.msra.mxu0 0
    %1373 = vmatprep.subr.bf16.mxu0 0
    %1374 = vmatpush1.bf16.msra.mxu0 0
    %1375 = vmatprep.subr.bf16.mxu0 0
    %1376 = vmatpush1.bf16.msra.mxu0 0
    %1377 = vmatprep.subr.bf16.mxu0 0
    %1378 = vmatpush1.bf16.msra.mxu0 0
    %1379 = vmatprep.mubr.bf16.mxu0 0
    %1380 = vmatmul.mubr.bf16.gmra.mrb[0].mxu0 %v1274
    %v1381 = vpop.f32.mrb[0].mxu0
    %v1382 = vadd.f32 0.0, %v1381
    %v1383 = vpop.f32.mrb[0].mxu0
    %v1384 = vpop.f32.mrb[0].mxu0
    %v1385 = vadd.f32 0.0, %v1384
    %v1386 = vpop.f32.mrb[0].mxu0
    %1387 = vmatprep.mubr.bf16.mxu0 0
    %1388 = vmatmul.mubr.bf16.gmra.mrb[0].mxu0 %v1275
    %v1389 = vpop.f32.mrb[0].mxu0
    %v1390 = vadd.f32 0.0, %v1389
    %v1391 = vpop.f32.mrb[0].mxu0
    %v1392 = vpop.f32.mrb[0].mxu0
    %v1393 = vadd.f32 0.0, %v1392
    %v1394 = vpop.f32.mrb[0].mxu0
    %1395 = vmatprep.mubr.bf16.mxu0 0
    %1396 = vmatmul.mubr.bf16.gmra.mrb[0].mxu0 %v1276
    %v1397 = vpop.f32.mrb[0].mxu0
    %v1398 = vadd.f32 0.0, %v1397
    %v1399 = vpop.f32.mrb[0].mxu0
    %v1400 = vpop.f32.mrb[0].mxu0
    %v1401 = vadd.f32 0.0, %v1400
    %v1402 = vpop.f32.mrb[0].mxu0
    %1403 = vmatprep.mubr.bf16.mxu0 0
    %1404 = vmatmul.mubr.bf16.gmra.mrb[0].mxu0 %v1277
    %v1405 = vpop.f32.mrb[0].mxu0
    %v1406 = vadd.f32 0.0, %v1405
    %v1407 = vpop.f32.mrb[0].mxu0
    %v1408 = vpop.f32.mrb[0].mxu0
    %v1409 = vadd.f32 0.0, %v1408
    %v1410 = vpop.f32.mrb[0].mxu0
    %1411 = vmatprep.mubr.bf16.mxu0 0
    %1412 = vmatmul.mubr.bf16.gmra.mrb[0].mxu0 %v1278
    %v1413 = vpop.f32.mrb[0].mxu0
    %v1414 = vadd.f32 0.0, %v1413
    %v1415 = vpop.f32.mrb[0].mxu0
    %v1416 = vpop.f32.mrb[0].mxu0
    %v1417 = vadd.f32 0.0, %v1416
    %v1418 = vpop.f32.mrb[0].mxu0
    %1419 = vmatprep.mubr.bf16.mxu0 0
    %1420 = vmatmul.mubr.bf16.gmra.mrb[0].mxu0 %v1279
    %v1421 = vpop.f32.mrb[0].mxu0
    %v1422 = vadd.f32 0.0, %v1421
    %v1423 = vpop.f32.mrb[0].mxu0
    %v1424 = vpop.f32.mrb[0].mxu0
    %v1425 = vadd.f32 0.0, %v1424
    %v1426 = vpop.f32.mrb[0].mxu0
    %1427 = vmatprep.mubr.bf16.mxu0 0
    %1428 = vmatmul.mubr.bf16.gmra.mrb[0].mxu0 %v1280
    %v1429 = vpop.f32.mrb[0].mxu0
    %v1430 = vadd.f32 0.0, %v1429
    %v1431 = vpop.f32.mrb[0].mxu0
    %v1432 = vpop.f32.mrb[0].mxu0
    %v1433 = vadd.f32 0.0, %v1432
    %v1434 = vpop.f32.mrb[0].mxu0
    %1435 = vmatprep.mubr.bf16.mxu0 0
    %1436 = vmatmul.mubr.bf16.gmra.mrb[0].mxu0 %v1281
    %v1437 = vpop.f32.mrb[0].mxu0
    %v1438 = vadd.f32 0.0, %v1437
    %v1439 = vpop.f32.mrb[0].mxu0
    %v1440 = vpop.f32.mrb[0].mxu0
    %v1441 = vadd.f32 0.0, %v1440
    %v1442 = vpop.f32.mrb[0].mxu0
    %1443 = vdwg.mxu0
    %v1444 = vpack.c.bf16 %v1385, %v1382
    %v1445 = vpack.c.bf16 %v1393, %v1390
    %v1446 = vpack.c.bf16 %v1401, %v1398
    %v1447 = vpack.c.bf16 %v1409, %v1406
    %v1448 = vpack.c.bf16 %v1417, %v1414
    %v1449 = vpack.c.bf16 %v1425, %v1422
    %v1450 = vpack.c.bf16 %v1433, %v1430
    %v1451 = vpack.c.bf16 %v1441, %v1438
    %1452 = vst [vmem:[#allocation2] sm:$0xff] %v1444
    %1453 = vst [vmem:[#allocation2 + $0x8] sm:$0xff] %v1445
    %1454 = vst [vmem:[#allocation2 + $0x10] sm:$0xff] %v1446
    %1455 = vst [vmem:[#allocation2 + $0x18] sm:$0xff] %v1447
    %1456 = vst [vmem:[#allocation2 + $0x20] sm:$0xff] %v1448
    %1457 = vst [vmem:[#allocation2 + $0x28] sm:$0xff] %v1449
    %1458 = vst [vmem:[#allocation2 + $0x30] sm:$0xff] %v1450
    %1459 = vst [vmem:[#allocation2 + $0x38] sm:$0xff] %v1451
    %s1460 = scalar_lea.vmem [#allocation8], 256
    %v1461 = vld [vmem:[%s1460] sm:$0xf]
    %v1462 = vld [vmem:[%s1460 + $0x4] sm:$0xf]
    %v1463 = vld [vmem:[%s1460 + $0x8] sm:$0xf]
    %v1464 = vld [vmem:[%s1460 + $0xc] sm:$0xf]
    %v1465 = vld [vmem:[%s1460 + $0x10] sm:$0xf]
    %v1466 = vld [vmem:[%s1460 + $0x14] sm:$0xf]
    %v1467 = vld [vmem:[%s1460 + $0x18] sm:$0xf]
    %v1468 = vld [vmem:[%s1460 + $0x1c] sm:$0xf]
    %v1469 = vld [vmem:[%s1460 + $0x20] sm:$0xf]
    %v1470 = vld [vmem:[%s1460 + $0x24] sm:$0xf]
    %v1471 = vld [vmem:[%s1460 + $0x28] sm:$0xf]
    %v1472 = vld [vmem:[%s1460 + $0x2c] sm:$0xf]
    %v1473 = vld [vmem:[%s1460 + $0x30] sm:$0xf]
    %v1474 = vld [vmem:[%s1460 + $0x34] sm:$0xf]
    %v1475 = vld [vmem:[%s1460 + $0x38] sm:$0xf]
    %v1476 = vld [vmem:[%s1460 + $0x3c] sm:$0xf]
    %v1493 = vunpack.c.l.b16 %v1461
    %v1494 = vunpack.c.l.b16 %v1462
    %v1495 = vunpack.c.l.b16 %v1463
    %v1496 = vunpack.c.l.b16 %v1464
    %v1497 = vunpack.c.l.b16 %v1465
    %v1498 = vunpack.c.l.b16 %v1466
    %v1499 = vunpack.c.l.b16 %v1467
    %v1500 = vunpack.c.l.b16 %v1468
    %v1501 = vunpack.c.l.b16 %v1469
    %v1502 = vunpack.c.l.b16 %v1470
    %v1503 = vunpack.c.l.b16 %v1471
    %v1504 = vunpack.c.l.b16 %v1472
    %v1505 = vunpack.c.l.b16 %v1473
    %v1506 = vunpack.c.l.b16 %v1474
    %v1507 = vunpack.c.l.b16 %v1475
    %v1508 = vunpack.c.l.b16 %v1476
    %v1509 = vpack.c.b16 %v1494, %v1493
    %v1510 = vpack.c.b16 %v1496, %v1495
    %v1511 = vpack.c.b16 %v1498, %v1497
    %v1512 = vpack.c.b16 %v1500, %v1499
    %v1513 = vpack.c.b16 %v1502, %v1501
    %v1514 = vpack.c.b16 %v1504, %v1503
    %v1515 = vpack.c.b16 %v1506, %v1505
    %v1516 = vpack.c.b16 %v1508, %v1507
    %1525 = vmatprep.subr.bf16.mxu0 0
    %1526 = vmatpush1.bf16.msra.mxu0 %v1509
    %1527 = vmatprep.subr.bf16.mxu0 0
    %1528 = vmatpush1.bf16.msra.mxu0 %v1510
    %1529 = vmatprep.subr.bf16.mxu0 0
    %1530 = vmatpush1.bf16.msra.mxu0 %v1511
    %1531 = vmatprep.subr.bf16.mxu0 0
    %1532 = vmatpush1.bf16.msra.mxu0 %v1512
    %1533 = vmatprep.subr.bf16.mxu0 0
    %1534 = vmatpush1.bf16.msra.mxu0 %v1513
    %1535 = vmatprep.subr.bf16.mxu0 0
    %1536 = vmatpush1.bf16.msra.mxu0 %v1514
    %1537 = vmatprep.subr.bf16.mxu0 0
    %1538 = vmatpush1.bf16.msra.mxu0 %v1515
    %1539 = vmatprep.subr.bf16.mxu0 0
    %1540 = vmatpush1.bf16.msra.mxu0 %v1516
    %1541 = vmatprep.subr.bf16.mxu0 0
    %1542 = vmatpush1.bf16.msra.mxu0 0
    %1543 = vmatprep.subr.bf16.mxu0 0
    %1544 = vmatpush1.bf16.msra.mxu0 0
    %1545 = vmatprep.subr.bf16.mxu0 0
    %1546 = vmatpush1.bf16.msra.mxu0 0
    %1547 = vmatprep.subr.bf16.mxu0 0
    %1548 = vmatpush1.bf16.msra.mxu0 0
    %1549 = vmatprep.subr.bf16.mxu0 0
    %1550 = vmatpush1.bf16.msra.mxu0 0
    %1551 = vmatprep.subr.bf16.mxu0 0
    %1552 = vmatpush1.bf16.msra.mxu0 0
    %1553 = vmatprep.subr.bf16.mxu0 0
    %1554 = vmatpush1.bf16.msra.mxu0 0
    %1555 = vmatprep.subr.bf16.mxu0 0
    %1556 = vmatpush1.bf16.msra.mxu0 0
    %1557 = vmatprep.mubr.bf16.mxu0 0
    %1558 = vmatmul.mubr.bf16.gmra.mrb[0].mxu0 %v1274
    %v1559 = vpop.f32.mrb[0].mxu0
    %v1560 = vadd.f32 0.0, %v1559
    %v1561 = vpop.f32.mrb[0].mxu0
    %v1562 = vpop.f32.mrb[0].mxu0
    %v1563 = vadd.f32 0.0, %v1562
    %v1564 = vpop.f32.mrb[0].mxu0
    %1565 = vmatprep.mubr.bf16.mxu0 0
    %1566 = vmatmul.mubr.bf16.gmra.mrb[0].mxu0 %v1275
    %v1567 = vpop.f32.mrb[0].mxu0
    %v1568 = vadd.f32 0.0, %v1567
    %v1569 = vpop.f32.mrb[0].mxu0
    %v1570 = vpop.f32.mrb[0].mxu0
    %v1571 = vadd.f32 0.0, %v1570
    %v1572 = vpop.f32.mrb[0].mxu0
    %1573 = vmatprep.mubr.bf16.mxu0 0
    %1574 = vmatmul.mubr.bf16.gmra.mrb[0].mxu0 %v1276
    %v1575 = vpop.f32.mrb[0].mxu0
    %v1576 = vadd.f32 0.0, %v1575
    %v1577 = vpop.f32.mrb[0].mxu0
    %v1578 = vpop.f32.mrb[0].mxu0
    %v1579 = vadd.f32 0.0, %v1578
    %v1580 = vpop.f32.mrb[0].mxu0
    %1581 = vmatprep.mubr.bf16.mxu0 0
    %1582 = vmatmul.mubr.bf16.gmra.mrb[0].mxu0 %v1277
    %v1583 = vpop.f32.mrb[0].mxu0
    %v1584 = vadd.f32 0.0, %v1583
    %v1585 = vpop.f32.mrb[0].mxu0
    %v1586 = vpop.f32.mrb[0].mxu0
    %v1587 = vadd.f32 0.0, %v1586
    %v1588 = vpop.f32.mrb[0].mxu0
    %1589 = vmatprep.mubr.bf16.mxu0 0
    %1590 = vmatmul.mubr.bf16.gmra.mrb[0].mxu0 %v1278
    %v1591 = vpop.f32.mrb[0].mxu0
    %v1592 = vadd.f32 0.0, %v1591
    %v1593 = vpop.f32.mrb[0].mxu0
    %v1594 = vpop.f32.mrb[0].mxu0
    %v1595 = vadd.f32 0.0, %v1594
    %v1596 = vpop.f32.mrb[0].mxu0
    %1597 = vmatprep.mubr.bf16.mxu0 0
    %1598 = vmatmul.mubr.bf16.gmra.mrb[0].mxu0 %v1279
    %v1599 = vpop.f32.mrb[0].mxu0
    %v1600 = vadd.f32 0.0, %v1599
    %v1601 = vpop.f32.mrb[0].mxu0
    %v1602 = vpop.f32.mrb[0].mxu0
    %v1603 = vadd.f32 0.0, %v1602
    %v1604 = vpop.f32.mrb[0].mxu0
    %1605 = vmatprep.mubr.bf16.mxu0 0
    %1606 = vmatmul.mubr.bf16.gmra.mrb[0].mxu0 %v1280
    %v1607 = vpop.f32.mrb[0].mxu0
    %v1608 = vadd.f32 0.0, %v1607
    %v1609 = vpop.f32.mrb[0].mxu0
    %v1610 = vpop.f32.mrb[0].mxu0
    %v1611 = vadd.f32 0.0, %v1610
    %v1612 = vpop.f32.mrb[0].mxu0
    %1613 = vmatprep.mubr.bf16.mxu0 0
    %1614 = vmatmul.mubr.bf16.gmra.mrb[0].mxu0 %v1281
    %v1615 = vpop.f32.mrb[0].mxu0
    %v1616 = vadd.f32 0.0, %v1615
    %v1617 = vpop.f32.mrb[0].mxu0
    %v1618 = vpop.f32.mrb[0].mxu0
    %v1619 = vadd.f32 0.0, %v1618
    %v1620 = vpop.f32.mrb[0].mxu0
    %1621 = vdwg.mxu0
    %v1622 = vpack.c.bf16 %v1563, %v1560
    %v1623 = vpack.c.bf16 %v1571, %v1568
    %v1624 = vpack.c.bf16 %v1579, %v1576
    %v1625 = vpack.c.bf16 %v1587, %v1584
    %v1626 = vpack.c.bf16 %v1595, %v1592
    %v1627 = vpack.c.bf16 %v1603, %v1600
    %v1628 = vpack.c.bf16 %v1611, %v1608
    %v1629 = vpack.c.bf16 %v1619, %v1616
    %1630 = vst [vmem:[#allocation2 + $0x40] sm:$0xff] %v1622
    %1631 = vst [vmem:[#allocation2 + $0x48] sm:$0xff] %v1623
    %1632 = vst [vmem:[#allocation2 + $0x50] sm:$0xff] %v1624
    %1633 = vst [vmem:[#allocation2 + $0x58] sm:$0xff] %v1625
    %1634 = vst [vmem:[#allocation2 + $0x60] sm:$0xff] %v1626
    %1635 = vst [vmem:[#allocation2 + $0x68] sm:$0xff] %v1627
    %1636 = vst [vmem:[#allocation2 + $0x70] sm:$0xff] %v1628
    %1637 = vst [vmem:[#allocation2 + $0x78] sm:$0xff] %v1629
    %s1638 = scalar_lea.vmem [#allocation8], 320
    %v1639 = vld [vmem:[%s1638] sm:$0xf]
    %v1640 = vld [vmem:[%s1638 + $0x4] sm:$0xf]
    %v1641 = vld [vmem:[%s1638 + $0x8] sm:$0xf]
    %v1642 = vld [vmem:[%s1638 + $0xc] sm:$0xf]
    %v1643 = vld [vmem:[%s1638 + $0x10] sm:$0xf]
    %v1644 = vld [vmem:[%s1638 + $0x14] sm:$0xf]
    %v1645 = vld [vmem:[%s1638 + $0x18] sm:$0xf]
    %v1646 = vld [vmem:[%s1638 + $0x1c] sm:$0xf]
    %v1647 = vld [vmem:[%s1638 + $0x20] sm:$0xf]
    %v1648 = vld [vmem:[%s1638 + $0x24] sm:$0xf]
    %v1649 = vld [vmem:[%s1638 + $0x28] sm:$0xf]
    %v1650 = vld [vmem:[%s1638 + $0x2c] sm:$0xf]
    %v1651 = vld [vmem:[%s1638 + $0x30] sm:$0xf]
    %v1652 = vld [vmem:[%s1638 + $0x34] sm:$0xf]
    %v1653 = vld [vmem:[%s1638 + $0x38] sm:$0xf]
    %v1654 = vld [vmem:[%s1638 + $0x3c] sm:$0xf]
    %v1671 = vunpack.c.l.b16 %v1639
    %v1672 = vunpack.c.l.b16 %v1640
    %v1673 = vunpack.c.l.b16 %v1641
    %v1674 = vunpack.c.l.b16 %v1642
    %v1675 = vunpack.c.l.b16 %v1643
    %v1676 = vunpack.c.l.b16 %v1644
    %v1677 = vunpack.c.l.b16 %v1645
    %v1678 = vunpack.c.l.b16 %v1646
    %v1679 = vunpack.c.l.b16 %v1647
    %v1680 = vunpack.c.l.b16 %v1648
    %v1681 = vunpack.c.l.b16 %v1649
    %v1682 = vunpack.c.l.b16 %v1650
    %v1683 = vunpack.c.l.b16 %v1651
    %v1684 = vunpack.c.l.b16 %v1652
    %v1685 = vunpack.c.l.b16 %v1653
    %v1686 = vunpack.c.l.b16 %v1654
    %v1687 = vpack.c.b16 %v1672, %v1671
    %v1688 = vpack.c.b16 %v1674, %v1673
    %v1689 = vpack.c.b16 %v1676, %v1675
    %v1690 = vpack.c.b16 %v1678, %v1677
    %v1691 = vpack.c.b16 %v1680, %v1679
    %v1692 = vpack.c.b16 %v1682, %v1681
    %v1693 = vpack.c.b16 %v1684, %v1683
    %v1694 = vpack.c.b16 %v1686, %v1685
    %1703 = vmatprep.subr.bf16.mxu0 0
    %1704 = vmatpush1.bf16.msra.mxu0 %v1687
    %1705 = vmatprep.subr.bf16.mxu0 0
    %1706 = vmatpush1.bf16.msra.mxu0 %v1688
    %1707 = vmatprep.subr.bf16.mxu0 0
    %1708 = vmatpush1.bf16.msra.mxu0 %v1689
    %1709 = vmatprep.subr.bf16.mxu0 0
    %1710 = vmatpush1.bf16.msra.mxu0 %v1690
    %1711 = vmatprep.subr.bf16.mxu0 0
    %1712 = vmatpush1.bf16.msra.mxu0 %v1691
    %1713 = vmatprep.subr.bf16.mxu0 0
    %1714 = vmatpush1.bf16.msra.mxu0 %v1692
    %1715 = vmatprep.subr.bf16.mxu0 0
    %1716 = vmatpush1.bf16.msra.mxu0 %v1693
    %1717 = vmatprep.subr.bf16.mxu0 0
    %1718 = vmatpush1.bf16.msra.mxu0 %v1694
    %1719 = vmatprep.subr.bf16.mxu0 0
    %1720 = vmatpush1.bf16.msra.mxu0 0
    %1721 = vmatprep.subr.bf16.mxu0 0
    %1722 = vmatpush1.bf16.msra.mxu0 0
    %1723 = vmatprep.subr.bf16.mxu0 0
    %1724 = vmatpush1.bf16.msra.mxu0 0
    %1725 = vmatprep.subr.bf16.mxu0 0
    %1726 = vmatpush1.bf16.msra.mxu0 0
    %1727 = vmatprep.subr.bf16.mxu0 0
    %1728 = vmatpush1.bf16.msra.mxu0 0
    %1729 = vmatprep.subr.bf16.mxu0 0
    %1730 = vmatpush1.bf16.msra.mxu0 0
    %1731 = vmatprep.subr.bf16.mxu0 0
    %1732 = vmatpush1.bf16.msra.mxu0 0
    %1733 = vmatprep.subr.bf16.mxu0 0
    %1734 = vmatpush1.bf16.msra.mxu0 0
    %1735 = vmatprep.mubr.bf16.mxu0 0
    %1736 = vmatmul.mubr.bf16.gmra.mrb[0].mxu0 %v1274
    %v1737 = vpop.f32.mrb[0].mxu0
    %v1738 = vadd.f32 0.0, %v1737
    %v1739 = vpop.f32.mrb[0].mxu0
    %v1740 = vpop.f32.mrb[0].mxu0
    %v1741 = vadd.f32 0.0, %v1740
    %v1742 = vpop.f32.mrb[0].mxu0
    %1743 = vmatprep.mubr.bf16.mxu0 0
    %1744 = vmatmul.mubr.bf16.gmra.mrb[0].mxu0 %v1275
    %v1745 = vpop.f32.mrb[0].mxu0
    %v1746 = vadd.f32 0.0, %v1745
    %v1747 = vpop.f32.mrb[0].mxu0
    %v1748 = vpop.f32.mrb[0].mxu0
    %v1749 = vadd.f32 0.0, %v1748
    %v1750 = vpop.f32.mrb[0].mxu0
    %1751 = vmatprep.mubr.bf16.mxu0 0
    %1752 = vmatmul.mubr.bf16.gmra.mrb[0].mxu0 %v1276
    %v1753 = vpop.f32.mrb[0].mxu0
    %v1754 = vadd.f32 0.0, %v1753
    %v1755 = vpop.f32.mrb[0].mxu0
    %v1756 = vpop.f32.mrb[0].mxu0
    %v1757 = vadd.f32 0.0, %v1756
    %v1758 = vpop.f32.mrb[0].mxu0
    %1759 = vmatprep.mubr.bf16.mxu0 0
    %1760 = vmatmul.mubr.bf16.gmra.mrb[0].mxu0 %v1277
    %v1761 = vpop.f32.mrb[0].mxu0
    %v1762 = vadd.f32 0.0, %v1761
    %v1763 = vpop.f32.mrb[0].mxu0
    %v1764 = vpop.f32.mrb[0].mxu0
    %v1765 = vadd.f32 0.0, %v1764
    %v1766 = vpop.f32.mrb[0].mxu0
    %1767 = vmatprep.mubr.bf16.mxu0 0
    %1768 = vmatmul.mubr.bf16.gmra.mrb[0].mxu0 %v1278
    %v1769 = vpop.f32.mrb[0].mxu0
    %v1770 = vadd.f32 0.0, %v1769
    %v1771 = vpop.f32.mrb[0].mxu0
    %v1772 = vpop.f32.mrb[0].mxu0
    %v1773 = vadd.f32 0.0, %v1772
    %v1774 = vpop.f32.mrb[0].mxu0
    %1775 = vmatprep.mubr.bf16.mxu0 0
    %1776 = vmatmul.mubr.bf16.gmra.mrb[0].mxu0 %v1279
    %v1777 = vpop.f32.mrb[0].mxu0
    %v1778 = vadd.f32 0.0, %v1777
    %v1779 = vpop.f32.mrb[0].mxu0
    %v1780 = vpop.f32.mrb[0].mxu0
    %v1781 = vadd.f32 0.0, %v1780
    %v1782 = vpop.f32.mrb[0].mxu0
    %1783 = vmatprep.mubr.bf16.mxu0 0
    %1784 = vmatmul.mubr.bf16.gmra.mrb[0].mxu0 %v1280
    %v1785 = vpop.f32.mrb[0].mxu0
    %v1786 = vadd.f32 0.0, %v1785
    %v1787 = vpop.f32.mrb[0].mxu0
    %v1788 = vpop.f32.mrb[0].mxu0
    %v1789 = vadd.f32 0.0, %v1788
    %v1790 = vpop.f32.mrb[0].mxu0
    %1791 = vmatprep.mubr.bf16.mxu0 0
    %1792 = vmatmul.mubr.bf16.gmra.mrb[0].mxu0 %v1281
    %v1793 = vpop.f32.mrb[0].mxu0
    %v1794 = vadd.f32 0.0, %v1793
    %v1795 = vpop.f32.mrb[0].mxu0
    %v1796 = vpop.f32.mrb[0].mxu0
    %v1797 = vadd.f32 0.0, %v1796
    %v1798 = vpop.f32.mrb[0].mxu0
    %1799 = vdwg.mxu0
    %v1800 = vpack.c.bf16 %v1741, %v1738
    %v1801 = vpack.c.bf16 %v1749, %v1746
    %v1802 = vpack.c.bf16 %v1757, %v1754
    %v1803 = vpack.c.bf16 %v1765, %v1762
    %v1804 = vpack.c.bf16 %v1773, %v1770
    %v1805 = vpack.c.bf16 %v1781, %v1778
    %v1806 = vpack.c.bf16 %v1789, %v1786
    %v1807 = vpack.c.bf16 %v1797, %v1794
    %1808 = vst [vmem:[#allocation2 + $0x80] sm:$0xff] %v1800
    %1809 = vst [vmem:[#allocation2 + $0x88] sm:$0xff] %v1801
    %1810 = vst [vmem:[#allocation2 + $0x90] sm:$0xff] %v1802
    %1811 = vst [vmem:[#allocation2 + $0x98] sm:$0xff] %v1803
    %1812 = vst [vmem:[#allocation2 + $0xa0] sm:$0xff] %v1804
    %1813 = vst [vmem:[#allocation2 + $0xa8] sm:$0xff] %v1805
    %1814 = vst [vmem:[#allocation2 + $0xb0] sm:$0xff] %v1806
    %1815 = vst [vmem:[#allocation2 + $0xb8] sm:$0xff] %v1807
    %s1816 = scalar_lea.vmem [#allocation9], 64
    %v1817 = vld [vmem:[%s1816] sm:$0xf]
    %v1818 = vld [vmem:[%s1816 + $0x4] sm:$0xf]
    %v1819 = vld [vmem:[%s1816 + $0x8] sm:$0xf]
    %v1820 = vld [vmem:[%s1816 + $0xc] sm:$0xf]
    %v1821 = vld [vmem:[%s1816 + $0x10] sm:$0xf]
    %v1822 = vld [vmem:[%s1816 + $0x14] sm:$0xf]
    %v1823 = vld [vmem:[%s1816 + $0x18] sm:$0xf]
    %v1824 = vld [vmem:[%s1816 + $0x1c] sm:$0xf]
    %v1825 = vld [vmem:[%s1816 + $0x20] sm:$0xf]
    %v1826 = vld [vmem:[%s1816 + $0x24] sm:$0xf]
    %v1827 = vld [vmem:[%s1816 + $0x28] sm:$0xf]
    %v1828 = vld [vmem:[%s1816 + $0x2c] sm:$0xf]
    %v1829 = vld [vmem:[%s1816 + $0x30] sm:$0xf]
    %v1830 = vld [vmem:[%s1816 + $0x34] sm:$0xf]
    %v1831 = vld [vmem:[%s1816 + $0x38] sm:$0xf]
    %v1832 = vld [vmem:[%s1816 + $0x3c] sm:$0xf]
    %s1833 = scalar_lea.vmem %s4, 1
    %v1834 = vld [vmem:[%s1833] sm:$0x1]
    %v1836 = vlaneseq
    %v1837 = vshrl.u32 %v1836, 7
    %v1838 = vsub.s32 0, %v1837
    %v1839 = vrot.slane %v1834, %v1838
    %v1857 = vunpack.c.l.b16 %v1817
    %v1858 = vunpack.c.l.b16 %v1818
    %v1859 = vunpack.c.l.b16 %v1819
    %v1860 = vunpack.c.l.b16 %v1820
    %v1861 = vunpack.c.l.b16 %v1821
    %v1862 = vunpack.c.l.b16 %v1822
    %v1863 = vunpack.c.l.b16 %v1823
    %v1864 = vunpack.c.l.b16 %v1824
    %v1865 = vunpack.c.l.b16 %v1825
    %v1866 = vunpack.c.l.b16 %v1826
    %v1867 = vunpack.c.l.b16 %v1827
    %v1868 = vunpack.c.l.b16 %v1828
    %v1869 = vunpack.c.l.b16 %v1829
    %v1870 = vunpack.c.l.b16 %v1830
    %v1871 = vunpack.c.l.b16 %v1831
    %v1872 = vunpack.c.l.b16 %v1832
    %v1873 = vpack.c.b16 %v1858, %v1857
    %v1874 = vpack.c.b16 %v1860, %v1859
    %v1875 = vpack.c.b16 %v1862, %v1861
    %v1876 = vpack.c.b16 %v1864, %v1863
    %v1877 = vpack.c.b16 %v1866, %v1865
    %v1878 = vpack.c.b16 %v1868, %v1867
    %v1879 = vpack.c.b16 %v1870, %v1869
    %v1880 = vpack.c.b16 %v1872, %v1871
    %1889 = vmatprep.subr.bf16.mxu0 0
    %1890 = vmatpush1.bf16.msra.mxu0 %v1873
    %1891 = vmatprep.subr.bf16.mxu0 0
    %1892 = vmatpush1.bf16.msra.mxu0 %v1874
    %1893 = vmatprep.subr.bf16.mxu0 0
    %1894 = vmatpush1.bf16.msra.mxu0 %v1875
    %1895 = vmatprep.subr.bf16.mxu0 0
    %1896 = vmatpush1.bf16.msra.mxu0 %v1876
    %1897 = vmatprep.subr.bf16.mxu0 0
    %1898 = vmatpush1.bf16.msra.mxu0 %v1877
    %1899 = vmatprep.subr.bf16.mxu0 0
    %1900 = vmatpush1.bf16.msra.mxu0 %v1878
    %1901 = vmatprep.subr.bf16.mxu0 0
    %1902 = vmatpush1.bf16.msra.mxu0 %v1879
    %1903 = vmatprep.subr.bf16.mxu0 0
    %1904 = vmatpush1.bf16.msra.mxu0 %v1880
    %1905 = vmatprep.subr.bf16.mxu0 0
    %1906 = vmatpush1.bf16.msra.mxu0 0
    %1907 = vmatprep.subr.bf16.mxu0 0
    %1908 = vmatpush1.bf16.msra.mxu0 0
    %1909 = vmatprep.subr.bf16.mxu0 0
    %1910 = vmatpush1.bf16.msra.mxu0 0
    %1911 = vmatprep.subr.bf16.mxu0 0
    %1912 = vmatpush1.bf16.msra.mxu0 0
    %1913 = vmatprep.subr.bf16.mxu0 0
    %1914 = vmatpush1.bf16.msra.mxu0 0
    %1915 = vmatprep.subr.bf16.mxu0 0
    %1916 = vmatpush1.bf16.msra.mxu0 0
    %1917 = vmatprep.subr.bf16.mxu0 0
    %1918 = vmatpush1.bf16.msra.mxu0 0
    %1919 = vmatprep.subr.bf16.mxu0 0
    %1920 = vmatpush1.bf16.msra.mxu0 0
    %1921 = vmatprep.mubr.bf16.mxu0 0
    %1922 = vmatmul.mubr.bf16.gmra.mrb[0].mxu0 %v1274
    %v1923 = vpop.f32.mrb[0].mxu0
    %v1924 = vadd.f32 %v1839, %v1923
    %v1925 = vpop.f32.mrb[0].mxu0
    %v1926 = vpop.f32.mrb[0].mxu0
    %v1927 = vadd.f32 %v1839, %v1926
    %v1928 = vpop.f32.mrb[0].mxu0
    %1929 = vmatprep.mubr.bf16.mxu0 0
    %1930 = vmatmul.mubr.bf16.gmra.mrb[0].mxu0 %v1275
    %v1931 = vpop.f32.mrb[0].mxu0
    %v1932 = vadd.f32 %v1839, %v1931
    %v1933 = vpop.f32.mrb[0].mxu0
    %v1934 = vpop.f32.mrb[0].mxu0
    %v1935 = vadd.f32 %v1839, %v1934
    %v1936 = vpop.f32.mrb[0].mxu0
    %1937 = vmatprep.mubr.bf16.mxu0 0
    %1938 = vmatmul.mubr.bf16.gmra.mrb[0].mxu0 %v1276
    %v1939 = vpop.f32.mrb[0].mxu0
    %v1940 = vadd.f32 %v1839, %v1939
    %v1941 = vpop.f32.mrb[0].mxu0
    %v1942 = vpop.f32.mrb[0].mxu0
    %v1943 = vadd.f32 %v1839, %v1942
    %v1944 = vpop.f32.mrb[0].mxu0
    %1945 = vmatprep.mubr.bf16.mxu0 0
    %1946 = vmatmul.mubr.bf16.gmra.mrb[0].mxu0 %v1277
    %v1947 = vpop.f32.mrb[0].mxu0
    %v1948 = vadd.f32 %v1839, %v1947
    %v1949 = vpop.f32.mrb[0].mxu0
    %v1950 = vpop.f32.mrb[0].mxu0
    %v1951 = vadd.f32 %v1839, %v1950
    %v1952 = vpop.f32.mrb[0].mxu0
    %1953 = vmatprep.mubr.bf16.mxu0 0
    %1954 = vmatmul.mubr.bf16.gmra.mrb[0].mxu0 %v1278
    %v1955 = vpop.f32.mrb[0].mxu0
    %v1956 = vadd.f32 %v1839, %v1955
    %v1957 = vpop.f32.mrb[0].mxu0
    %v1958 = vpop.f32.mrb[0].mxu0
    %v1959 = vadd.f32 %v1839, %v1958
    %v1960 = vpop.f32.mrb[0].mxu0
    %1961 = vmatprep.mubr.bf16.mxu0 0
    %1962 = vmatmul.mubr.bf16.gmra.mrb[0].mxu0 %v1279
    %v1963 = vpop.f32.mrb[0].mxu0
    %v1964 = vadd.f32 %v1839, %v1963
    %v1965 = vpop.f32.mrb[0].mxu0
    %v1966 = vpop.f32.mrb[0].mxu0
    %v1967 = vadd.f32 %v1839, %v1966
    %v1968 = vpop.f32.mrb[0].mxu0
    %1969 = vmatprep.mubr.bf16.mxu0 0
    %1970 = vmatmul.mubr.bf16.gmra.mrb[0].mxu0 %v1280
    %v1971 = vpop.f32.mrb[0].mxu0
    %v1972 = vadd.f32 %v1839, %v1971
    %v1973 = vpop.f32.mrb[0].mxu0
    %v1974 = vpop.f32.mrb[0].mxu0
    %v1975 = vadd.f32 %v1839, %v1974
    %v1976 = vpop.f32.mrb[0].mxu0
    %1977 = vmatprep.mubr.bf16.mxu0 0
    %1978 = vmatmul.mubr.bf16.gmra.mrb[0].mxu0 %v1281
    %v1979 = vpop.f32.mrb[0].mxu0
    %v1980 = vadd.f32 %v1839, %v1979
    %v1981 = vpop.f32.mrb[0].mxu0
    %v1982 = vpop.f32.mrb[0].mxu0
    %v1983 = vadd.f32 %v1839, %v1982
    %v1984 = vpop.f32.mrb[0].mxu0
    %1985 = vdwg.mxu0
    %v1986 = vld [vmem:[#allocation2] sm:$0xff]
    %v1987 = vld [vmem:[#allocation2 + $0x8] sm:$0xff]
    %v1988 = vld [vmem:[#allocation2 + $0x10] sm:$0xff]
    %v1989 = vld [vmem:[#allocation2 + $0x18] sm:$0xff]
    %v1990 = vld [vmem:[#allocation2 + $0x20] sm:$0xff]
    %v1991 = vld [vmem:[#allocation2 + $0x28] sm:$0xff]
    %v1992 = vld [vmem:[#allocation2 + $0x30] sm:$0xff]
    %v1993 = vld [vmem:[#allocation2 + $0x38] sm:$0xff]
    %v1994 = vld [vmem:[#allocation2 + $0x40] sm:$0xff]
    %v1995 = vld [vmem:[#allocation2 + $0x48] sm:$0xff]
    %v1996 = vld [vmem:[#allocation2 + $0x50] sm:$0xff]
    %v1997 = vld [vmem:[#allocation2 + $0x58] sm:$0xff]
    %v1998 = vld [vmem:[#allocation2 + $0x60] sm:$0xff]
    %v1999 = vld [vmem:[#allocation2 + $0x68] sm:$0xff]
    %v2000 = vld [vmem:[#allocation2 + $0x70] sm:$0xff]
    %v2001 = vld [vmem:[#allocation2 + $0x78] sm:$0xff]
    %v2002 = vld [vmem:[#allocation2 + $0x80] sm:$0xff]
    %v2003 = vld [vmem:[#allocation2 + $0x88] sm:$0xff]
    %v2004 = vld [vmem:[#allocation2 + $0x90] sm:$0xff]
    %v2005 = vld [vmem:[#allocation2 + $0x98] sm:$0xff]
    %v2006 = vld [vmem:[#allocation2 + $0xa0] sm:$0xff]
    %v2007 = vld [vmem:[#allocation2 + $0xa8] sm:$0xff]
    %v2008 = vld [vmem:[#allocation2 + $0xb0] sm:$0xff]
    %v2009 = vld [vmem:[#allocation2 + $0xb8] sm:$0xff]
    %2010 = vmatprep.subr.bf16.mxu0 0
    %2011 = vmatpush1.bf16.msra.mxu0 %v1986
    %2012 = vmatprep.subr.bf16.mxu0 0
    %2013 = vmatpush1.bf16.msra.mxu0 %v1987
    %2014 = vmatprep.subr.bf16.mxu0 0
    %2015 = vmatpush1.bf16.msra.mxu0 %v1988
    %2016 = vmatprep.subr.bf16.mxu0 0
    %2017 = vmatpush1.bf16.msra.mxu0 %v1989
    %2018 = vmatprep.subr.bf16.mxu0 0
    %2019 = vmatpush1.bf16.msra.mxu0 %v1990
    %2020 = vmatprep.subr.bf16.mxu0 0
    %2021 = vmatpush1.bf16.msra.mxu0 %v1991
    %2022 = vmatprep.subr.bf16.mxu0 0
    %2023 = vmatpush1.bf16.msra.mxu0 %v1992
    %2024 = vmatprep.subr.bf16.mxu0 0
    %2025 = vmatpush1.bf16.msra.mxu0 %v1993
    %2026 = vmatprep.subr.bf16.mxu0 0
    %2027 = vmatpush1.bf16.msra.mxu0 %v1994
    %2028 = vmatprep.subr.bf16.mxu0 0
    %2029 = vmatpush1.bf16.msra.mxu0 %v1995
    %2030 = vmatprep.subr.bf16.mxu0 0
    %2031 = vmatpush1.bf16.msra.mxu0 %v1996
    %2032 = vmatprep.subr.bf16.mxu0 0
    %2033 = vmatpush1.bf16.msra.mxu0 %v1997
    %2034 = vmatprep.subr.bf16.mxu0 0
    %2035 = vmatpush1.bf16.msra.mxu0 %v1998
    %2036 = vmatprep.subr.bf16.mxu0 0
    %2037 = vmatpush1.bf16.msra.mxu0 %v1999
    %2038 = vmatprep.subr.bf16.mxu0 0
    %2039 = vmatpush1.bf16.msra.mxu0 %v2000
    %2040 = vmatprep.subr.bf16.mxu0 0
    %2041 = vmatpush1.bf16.msra.mxu0 %v2001
    %2042 = vmatprep.mubr.bf16.mxu0 %v1001
    %2043 = vmatmul.mubr.bf16.gmra.mrb[0].mxu0 %v1000
    %v2044 = vpop.f32.mrb[0].mxu0
    %v2045 = vadd.f32 0.0, %v2044
    %v2046 = vpop.f32.mrb[0].mxu0
    %v2047 = vpop.f32.mrb[0].mxu0
    %v2048 = vadd.f32 0.0, %v2047
    %v2049 = vpop.f32.mrb[0].mxu0
    %2050 = vmatprep.mubr.bf16.mxu0 %v1004
    %2051 = vmatmul.mubr.bf16.gmra.mrb[0].mxu0 %v1003
    %v2052 = vpop.f32.mrb[0].mxu0
    %v2053 = vadd.f32 0.0, %v2052
    %v2054 = vpop.f32.mrb[0].mxu0
    %v2055 = vpop.f32.mrb[0].mxu0
    %v2056 = vadd.f32 0.0, %v2055
    %v2057 = vpop.f32.mrb[0].mxu0
    %2058 = vmatprep.mubr.bf16.mxu0 %v1007
    %2059 = vmatmul.mubr.bf16.gmra.mrb[0].mxu0 %v1006
    %v2060 = vpop.f32.mrb[0].mxu0
    %v2061 = vadd.f32 0.0, %v2060
    %v2062 = vpop.f32.mrb[0].mxu0
    %v2063 = vpop.f32.mrb[0].mxu0
    %v2064 = vadd.f32 0.0, %v2063
    %v2065 = vpop.f32.mrb[0].mxu0
    %2066 = vmatprep.mubr.bf16.mxu0 %v1010
    %2067 = vmatmul.mubr.bf16.gmra.mrb[0].mxu0 %v1009
    %v2068 = vpop.f32.mrb[0].mxu0
    %v2069 = vadd.f32 0.0, %v2068
    %v2070 = vpop.f32.mrb[0].mxu0
    %v2071 = vpop.f32.mrb[0].mxu0
    %v2072 = vadd.f32 0.0, %v2071
    %v2073 = vpop.f32.mrb[0].mxu0
    %2074 = vmatprep.mubr.bf16.mxu0 %v1013
    %2075 = vmatmul.mubr.bf16.gmra.mrb[0].mxu0 %v1012
    %v2076 = vpop.f32.mrb[0].mxu0
    %v2077 = vadd.f32 0.0, %v2076
    %v2078 = vpop.f32.mrb[0].mxu0
    %v2079 = vpop.f32.mrb[0].mxu0
    %v2080 = vadd.f32 0.0, %v2079
    %v2081 = vpop.f32.mrb[0].mxu0
    %2082 = vmatprep.mubr.bf16.mxu0 %v1016
    %2083 = vmatmul.mubr.bf16.gmra.mrb[0].mxu0 %v1015
    %v2084 = vpop.f32.mrb[0].mxu0
    %v2085 = vadd.f32 0.0, %v2084
    %v2086 = vpop.f32.mrb[0].mxu0
    %v2087 = vpop.f32.mrb[0].mxu0
    %v2088 = vadd.f32 0.0, %v2087
    %v2089 = vpop.f32.mrb[0].mxu0
    %2090 = vmatprep.mubr.bf16.mxu0 %v1019
    %2091 = vmatmul.mubr.bf16.gmra.mrb[0].mxu0 %v1018
    %v2092 = vpop.f32.mrb[0].mxu0
    %v2093 = vadd.f32 0.0, %v2092
    %v2094 = vpop.f32.mrb[0].mxu0
    %v2095 = vpop.f32.mrb[0].mxu0
    %v2096 = vadd.f32 0.0, %v2095
    %v2097 = vpop.f32.mrb[0].mxu0
    %2098 = vmatprep.mubr.bf16.mxu0 %v1022
    %2099 = vmatmul.mubr.bf16.gmra.mrb[0].mxu0 %v1021
    %v2100 = vpop.f32.mrb[0].mxu0
    %v2101 = vadd.f32 0.0, %v2100
    %v2102 = vpop.f32.mrb[0].mxu0
    %v2103 = vpop.f32.mrb[0].mxu0
    %v2104 = vadd.f32 0.0, %v2103
    %v2105 = vpop.f32.mrb[0].mxu0
    %2106 = vdwg.mxu0
    %2107 = vmatprep.subr.bf16.mxu0 0
    %2108 = vmatpush1.bf16.msra.mxu0 %v2002
    %2109 = vmatprep.subr.bf16.mxu0 0
    %2110 = vmatpush1.bf16.msra.mxu0 %v2003
    %2111 = vmatprep.subr.bf16.mxu0 0
    %2112 = vmatpush1.bf16.msra.mxu0 %v2004
    %2113 = vmatprep.subr.bf16.mxu0 0
    %2114 = vmatpush1.bf16.msra.mxu0 %v2005
    %2115 = vmatprep.subr.bf16.mxu0 0
    %2116 = vmatpush1.bf16.msra.mxu0 %v2006
    %2117 = vmatprep.subr.bf16.mxu0 0
    %2118 = vmatpush1.bf16.msra.mxu0 %v2007
    %2119 = vmatprep.subr.bf16.mxu0 0
    %2120 = vmatpush1.bf16.msra.mxu0 %v2008
    %2121 = vmatprep.subr.bf16.mxu0 0
    %2122 = vmatpush1.bf16.msra.mxu0 %v2009
    %2123 = vmatprep.subr.bf16.mxu0 0
    %2124 = vmatpush1.bf16.msra.mxu0 0
    %2125 = vmatprep.subr.bf16.mxu0 0
    %2126 = vmatpush1.bf16.msra.mxu0 0
    %2127 = vmatprep.subr.bf16.mxu0 0
    %2128 = vmatpush1.bf16.msra.mxu0 0
    %2129 = vmatprep.subr.bf16.mxu0 0
    %2130 = vmatpush1.bf16.msra.mxu0 0
    %2131 = vmatprep.subr.bf16.mxu0 0
    %2132 = vmatpush1.bf16.msra.mxu0 0
    %2133 = vmatprep.subr.bf16.mxu0 0
    %2134 = vmatpush1.bf16.msra.mxu0 0
    %2135 = vmatprep.subr.bf16.mxu0 0
    %2136 = vmatpush1.bf16.msra.mxu0 0
    %2137 = vmatprep.subr.bf16.mxu0 0
    %2138 = vmatpush1.bf16.msra.mxu0 0
    %2139 = vmatprep.mubr.bf16.mxu0 0
    %2140 = vmatmul.mubr.bf16.gmra.mrb[0].mxu0 %v1002
    %v2141 = vpop.f32.mrb[0].mxu0
    %v2142 = vadd.f32 %v2045, %v2141
    %v2143 = vpop.f32.mrb[0].mxu0
    %v2144 = vpop.f32.mrb[0].mxu0
    %v2145 = vadd.f32 %v2048, %v2144
    %v2146 = vpop.f32.mrb[0].mxu0
    %2147 = vmatprep.mubr.bf16.mxu0 0
    %2148 = vmatmul.mubr.bf16.gmra.mrb[0].mxu0 %v1005
    %v2149 = vpop.f32.mrb[0].mxu0
    %v2150 = vadd.f32 %v2053, %v2149
    %v2151 = vpop.f32.mrb[0].mxu0
    %v2152 = vpop.f32.mrb[0].mxu0
    %v2153 = vadd.f32 %v2056, %v2152
    %v2154 = vpop.f32.mrb[0].mxu0
    %2155 = vmatprep.mubr.bf16.mxu0 0
    %2156 = vmatmul.mubr.bf16.gmra.mrb[0].mxu0 %v1008
    %v2157 = vpop.f32.mrb[0].mxu0
    %v2158 = vadd.f32 %v2061, %v2157
    %v2159 = vpop.f32.mrb[0].mxu0
    %v2160 = vpop.f32.mrb[0].mxu0
    %v2161 = vadd.f32 %v2064, %v2160
    %v2162 = vpop.f32.mrb[0].mxu0
    %2163 = vmatprep.mubr.bf16.mxu0 0
    %2164 = vmatmul.mubr.bf16.gmra.mrb[0].mxu0 %v1011
    %v2165 = vpop.f32.mrb[0].mxu0
    %v2166 = vadd.f32 %v2069, %v2165
    %v2167 = vpop.f32.mrb[0].mxu0
    %v2168 = vpop.f32.mrb[0].mxu0
    %v2169 = vadd.f32 %v2072, %v2168
    %v2170 = vpop.f32.mrb[0].mxu0
    %2171 = vmatprep.mubr.bf16.mxu0 0
    %2172 = vmatmul.mubr.bf16.gmra.mrb[0].mxu0 %v1014
    %v2173 = vpop.f32.mrb[0].mxu0
    %v2174 = vadd.f32 %v2077, %v2173
    %v2175 = vpop.f32.mrb[0].mxu0
    %v2176 = vpop.f32.mrb[0].mxu0
    %v2177 = vadd.f32 %v2080, %v2176
    %v2178 = vpop.f32.mrb[0].mxu0
    %2179 = vmatprep.mubr.bf16.mxu0 0
    %2180 = vmatmul.mubr.bf16.gmra.mrb[0].mxu0 %v1017
    %v2181 = vpop.f32.mrb[0].mxu0
    %v2182 = vadd.f32 %v2085, %v2181
    %v2183 = vpop.f32.mrb[0].mxu0
    %v2184 = vpop.f32.mrb[0].mxu0
    %v2185 = vadd.f32 %v2088, %v2184
    %v2186 = vpop.f32.mrb[0].mxu0
    %2187 = vmatprep.mubr.bf16.mxu0 0
    %2188 = vmatmul.mubr.bf16.gmra.mrb[0].mxu0 %v1020
    %v2189 = vpop.f32.mrb[0].mxu0
    %v2190 = vadd.f32 %v2093, %v2189
    %v2191 = vpop.f32.mrb[0].mxu0
    %v2192 = vpop.f32.mrb[0].mxu0
    %v2193 = vadd.f32 %v2096, %v2192
    %v2194 = vpop.f32.mrb[0].mxu0
    %2195 = vmatprep.mubr.bf16.mxu0 0
    %2196 = vmatmul.mubr.bf16.gmra.mrb[0].mxu0 %v1023
    %v2197 = vpop.f32.mrb[0].mxu0
    %v2198 = vadd.f32 %v2101, %v2197
    %v2199 = vpop.f32.mrb[0].mxu0
    %v2200 = vpop.f32.mrb[0].mxu0
    %v2201 = vadd.f32 %v2104, %v2200
    %v2202 = vpop.f32.mrb[0].mxu0
    %2203 = vdwg.mxu0
    %v2204 = vadd.f32 %v1924, %v2142
    %v2205 = vadd.f32 %v1927, %v2145
    %v2206 = vadd.f32 %v1932, %v2150
    %v2207 = vadd.f32 %v1935, %v2153
    %v2208 = vadd.f32 %v1940, %v2158
    %v2209 = vadd.f32 %v1943, %v2161
    %v2210 = vadd.f32 %v1948, %v2166
    %v2211 = vadd.f32 %v1951, %v2169
    %v2212 = vadd.f32 %v1956, %v2174
    %v2213 = vadd.f32 %v1959, %v2177
    %v2214 = vadd.f32 %v1964, %v2182
    %v2215 = vadd.f32 %v1967, %v2185
    %v2216 = vadd.f32 %v1972, %v2190
    %v2217 = vadd.f32 %v1975, %v2193
    %v2218 = vadd.f32 %v1980, %v2198
    %v2219 = vadd.f32 %v1983, %v2201
    %v2220 = vmax.f32 %v2204, 0.0
    %v2221 = vmax.f32 %v2205, 0.0
    %v2222 = vmax.f32 %v2206, 0.0
    %v2223 = vmax.f32 %v2207, 0.0
    %v2224 = vmax.f32 %v2208, 0.0
    %v2225 = vmax.f32 %v2209, 0.0
    %v2226 = vmax.f32 %v2210, 0.0
    %v2227 = vmax.f32 %v2211, 0.0
    %v2228 = vmax.f32 %v2212, 0.0
    %v2229 = vmax.f32 %v2213, 0.0
    %v2230 = vmax.f32 %v2214, 0.0
    %v2231 = vmax.f32 %v2215, 0.0
    %v2232 = vmax.f32 %v2216, 0.0
    %v2233 = vmax.f32 %v2217, 0.0
    %v2234 = vmax.f32 %v2218, 0.0
    %v2235 = vmax.f32 %v2219, 0.0
    %v2236 = vpack.c.bf16 %v2221, %v2220
    %v2237 = vpack.c.bf16 %v2223, %v2222
    %v2238 = vpack.c.bf16 %v2225, %v2224
    %v2239 = vpack.c.bf16 %v2227, %v2226
    %v2240 = vpack.c.bf16 %v2229, %v2228
    %v2241 = vpack.c.bf16 %v2231, %v2230
    %v2242 = vpack.c.bf16 %v2233, %v2232
    %v2243 = vpack.c.bf16 %v2235, %v2234
    %v2244 = vld [vmem:[%s7] sm:$0x3]
    %2245 = vmatprep.subr.bf16.mxu0 0
    %2246 = vmatpush1.bf16.msra.mxu0 %v2236
    %2247 = vmatprep.subr.bf16.mxu0 0
    %2248 = vmatpush1.bf16.msra.mxu0 %v2237
    %2249 = vmatprep.subr.bf16.mxu0 0
    %2250 = vmatpush1.bf16.msra.mxu0 %v2238
    %2251 = vmatprep.subr.bf16.mxu0 0
    %2252 = vmatpush1.bf16.msra.mxu0 %v2239
    %2253 = vmatprep.subr.bf16.mxu0 0
    %2254 = vmatpush1.bf16.msra.mxu0 %v2240
    %2255 = vmatprep.subr.bf16.mxu0 0
    %2256 = vmatpush1.bf16.msra.mxu0 %v2241
    %2257 = vmatprep.subr.bf16.mxu0 0
    %2258 = vmatpush1.bf16.msra.mxu0 %v2242
    %2259 = vmatprep.subr.bf16.mxu0 0
    %2260 = vmatpush1.bf16.msra.mxu0 %v2243
    %2261 = vmatprep.subr.bf16.mxu0 0
    %2262 = vmatpush1.bf16.msra.mxu0 0
    %2263 = vmatprep.subr.bf16.mxu0 0
    %2264 = vmatpush1.bf16.msra.mxu0 0
    %2265 = vmatprep.subr.bf16.mxu0 0
    %2266 = vmatpush1.bf16.msra.mxu0 0
    %2267 = vmatprep.subr.bf16.mxu0 0
    %2268 = vmatpush1.bf16.msra.mxu0 0
    %2269 = vmatprep.subr.bf16.mxu0 0
    %2270 = vmatpush1.bf16.msra.mxu0 0
    %2271 = vmatprep.subr.bf16.mxu0 0
    %2272 = vmatpush1.bf16.msra.mxu0 0
    %2273 = vmatprep.subr.bf16.mxu0 0
    %2274 = vmatpush1.bf16.msra.mxu0 0
    %2275 = vmatprep.subr.bf16.mxu0 0
    %2276 = vmatpush1.bf16.msra.mxu0 0
    %2277 = vmatprep.mubr.bf16.mxu0 0
    %2278 = vmatmul.mubr.bf16.gmra.mrb[0].mxu0 %v2244
    %v2279 = vpop.f32.mrb[0].mxu0
    %v2280 = vadd.f32 0.0, %v2279
    %v2281 = vpop.f32.mrb[0].mxu0
    %v2282 = vpop.f32.mrb[0].mxu0
    %v2283 = vpop.f32.mrb[0].mxu0
    %2284 = vdwg.mxu0
    %v2285 = vpack.c.bf16 %v2280, %v2280
    %v2286 = vld [vmem:[%s6] sm:$0x1]
    %v2287 = vld [vmem:[#allocation11] sm:$0xf]
    %v2288 = vld [vmem:[#allocation11 + $0x4] sm:$0xf]
    %v2289 = vld [vmem:[#allocation11 + $0x8] sm:$0xf]
    %v2290 = vld [vmem:[#allocation11 + $0xc] sm:$0xf]
    %v2291 = vld [vmem:[#allocation11 + $0x10] sm:$0xf]
    %v2292 = vld [vmem:[#allocation11 + $0x14] sm:$0xf]
    %v2293 = vld [vmem:[#allocation11 + $0x18] sm:$0xf]
    %v2294 = vld [vmem:[#allocation11 + $0x1c] sm:$0xf]
    %v2295 = vld [vmem:[#allocation11 + $0x20] sm:$0xf]
    %v2296 = vld [vmem:[#allocation11 + $0x24] sm:$0xf]
    %v2297 = vld [vmem:[#allocation11 + $0x28] sm:$0xf]
    %v2298 = vld [vmem:[#allocation11 + $0x2c] sm:$0xf]
    %v2299 = vld [vmem:[#allocation11 + $0x30] sm:$0xf]
    %v2300 = vld [vmem:[#allocation11 + $0x34] sm:$0xf]
    %v2301 = vld [vmem:[#allocation11 + $0x38] sm:$0xf]
    %v2302 = vld [vmem:[#allocation11 + $0x3c] sm:$0xf]
    %v2319 = vunpack.c.l.b16 %v2287
    %v2320 = vunpack.c.l.b16 %v2288
    %v2321 = vunpack.c.l.b16 %v2289
    %v2322 = vunpack.c.l.b16 %v2290
    %v2323 = vunpack.c.l.b16 %v2291
    %v2324 = vunpack.c.l.b16 %v2292
    %v2325 = vunpack.c.l.b16 %v2293
    %v2326 = vunpack.c.l.b16 %v2294
    %v2327 = vunpack.c.l.b16 %v2295
    %v2328 = vunpack.c.l.b16 %v2296
    %v2329 = vunpack.c.l.b16 %v2297
    %v2330 = vunpack.c.l.b16 %v2298
    %v2331 = vunpack.c.l.b16 %v2299
    %v2332 = vunpack.c.l.b16 %v2300
    %v2333 = vunpack.c.l.b16 %v2301
    %v2334 = vunpack.c.l.b16 %v2302
    %v2335 = vpack.c.b16 %v2320, %v2319
    %v2336 = vpack.c.b16 %v2322, %v2321
    %v2337 = vpack.c.b16 %v2324, %v2323
    %v2338 = vpack.c.b16 %v2326, %v2325
    %v2339 = vpack.c.b16 %v2328, %v2327
    %v2340 = vpack.c.b16 %v2330, %v2329
    %v2341 = vpack.c.b16 %v2332, %v2331
    %v2342 = vpack.c.b16 %v2334, %v2333
    %2351 = vmatprep.subr.bf16.mxu0 0
    %2352 = vmatpush1.bf16.msra.mxu0 %v2335
    %2353 = vmatprep.subr.bf16.mxu0 0
    %2354 = vmatpush1.bf16.msra.mxu0 %v2336
    %2355 = vmatprep.subr.bf16.mxu0 0
    %2356 = vmatpush1.bf16.msra.mxu0 %v2337
    %2357 = vmatprep.subr.bf16.mxu0 0
    %2358 = vmatpush1.bf16.msra.mxu0 %v2338
    %2359 = vmatprep.subr.bf16.mxu0 0
    %2360 = vmatpush1.bf16.msra.mxu0 %v2339
    %2361 = vmatprep.subr.bf16.mxu0 0
    %2362 = vmatpush1.bf16.msra.mxu0 %v2340
    %2363 = vmatprep.subr.bf16.mxu0 0
    %2364 = vmatpush1.bf16.msra.mxu0 %v2341
    %2365 = vmatprep.subr.bf16.mxu0 0
    %2366 = vmatpush1.bf16.msra.mxu0 %v2342
    %2367 = vmatprep.subr.bf16.mxu0 0
    %2368 = vmatpush1.bf16.msra.mxu0 0
    %2369 = vmatprep.subr.bf16.mxu0 0
    %2370 = vmatpush1.bf16.msra.mxu0 0
    %2371 = vmatprep.subr.bf16.mxu0 0
    %2372 = vmatpush1.bf16.msra.mxu0 0
    %2373 = vmatprep.subr.bf16.mxu0 0
    %2374 = vmatpush1.bf16.msra.mxu0 0
    %2375 = vmatprep.subr.bf16.mxu0 0
    %2376 = vmatpush1.bf16.msra.mxu0 0
    %2377 = vmatprep.subr.bf16.mxu0 0
    %2378 = vmatpush1.bf16.msra.mxu0 0
    %2379 = vmatprep.subr.bf16.mxu0 0
    %2380 = vmatpush1.bf16.msra.mxu0 0
    %2381 = vmatprep.subr.bf16.mxu0 0
    %2382 = vmatpush1.bf16.msra.mxu0 0
    %2383 = vmatprep.mubr.bf16.mxu0 0
    %2384 = vmatmul.mubr.bf16.gmra.mrb[0].mxu0 %v2285
    %v2385 = vpop.f32.mrb[0].mxu0
    %v2386 = vadd.f32 0.0, %v2385
    %v2387 = vpop.f32.mrb[0].mxu0
    %v2388 = vpop.f32.mrb[0].mxu0
    %v2389 = vpop.f32.mrb[0].mxu0
    %2390 = vdwg.mxu0
    %v2391 = vadd.f32 %v2286, %v2386
    %s2392 = scalar_lea.vmem [#allocation11], 64
    %v2393 = vld [vmem:[%s2392] sm:$0xf]
    %v2394 = vld [vmem:[%s2392 + $0x4] sm:$0xf]
    %v2395 = vld [vmem:[%s2392 + $0x8] sm:$0xf]
    %v2396 = vld [vmem:[%s2392 + $0xc] sm:$0xf]
    %v2397 = vld [vmem:[%s2392 + $0x10] sm:$0xf]
    %v2398 = vld [vmem:[%s2392 + $0x14] sm:$0xf]
    %v2399 = vld [vmem:[%s2392 + $0x18] sm:$0xf]
    %v2400 = vld [vmem:[%s2392 + $0x1c] sm:$0xf]
    %v2401 = vld [vmem:[%s2392 + $0x20] sm:$0xf]
    %v2402 = vld [vmem:[%s2392 + $0x24] sm:$0xf]
    %v2403 = vld [vmem:[%s2392 + $0x28] sm:$0xf]
    %v2404 = vld [vmem:[%s2392 + $0x2c] sm:$0xf]
    %v2405 = vld [vmem:[%s2392 + $0x30] sm:$0xf]
    %v2406 = vld [vmem:[%s2392 + $0x34] sm:$0xf]
    %v2407 = vld [vmem:[%s2392 + $0x38] sm:$0xf]
    %v2408 = vld [vmem:[%s2392 + $0x3c] sm:$0xf]
    %v2410 = vshrl.u32 %v2285, 16
    %v2429 = vunpack.c.l.b16 %v2393
    %v2430 = vunpack.c.l.b16 %v2394
    %v2431 = vunpack.c.l.b16 %v2395
    %v2432 = vunpack.c.l.b16 %v2396
    %v2433 = vunpack.c.l.b16 %v2397
    %v2434 = vunpack.c.l.b16 %v2398
    %v2435 = vunpack.c.l.b16 %v2399
    %v2436 = vunpack.c.l.b16 %v2400
    %v2437 = vunpack.c.l.b16 %v2401
    %v2438 = vunpack.c.l.b16 %v2402
    %v2439 = vunpack.c.l.b16 %v2403
    %v2440 = vunpack.c.l.b16 %v2404
    %v2441 = vunpack.c.l.b16 %v2405
    %v2442 = vunpack.c.l.b16 %v2406
    %v2443 = vunpack.c.l.b16 %v2407
    %v2444 = vunpack.c.l.b16 %v2408
    %v2445 = vpack.c.b16 %v2430, %v2429
    %v2446 = vpack.c.b16 %v2432, %v2431
    %v2447 = vpack.c.b16 %v2434, %v2433
    %v2448 = vpack.c.b16 %v2436, %v2435
    %v2449 = vpack.c.b16 %v2438, %v2437
    %v2450 = vpack.c.b16 %v2440, %v2439
    %v2451 = vpack.c.b16 %v2442, %v2441
    %v2452 = vpack.c.b16 %v2444, %v2443
    %2461 = vmatprep.subr.bf16.mxu0 0
    %2462 = vmatpush1.bf16.msra.mxu0 %v2445
    %2463 = vmatprep.subr.bf16.mxu0 0
    %2464 = vmatpush1.bf16.msra.mxu0 %v2446
    %2465 = vmatprep.subr.bf16.mxu0 0
    %2466 = vmatpush1.bf16.msra.mxu0 %v2447
    %2467 = vmatprep.subr.bf16.mxu0 0
    %2468 = vmatpush1.bf16.msra.mxu0 %v2448
    %2469 = vmatprep.subr.bf16.mxu0 0
    %2470 = vmatpush1.bf16.msra.mxu0 %v2449
    %2471 = vmatprep.subr.bf16.mxu0 0
    %2472 = vmatpush1.bf16.msra.mxu0 %v2450
    %2473 = vmatprep.subr.bf16.mxu0 0
    %2474 = vmatpush1.bf16.msra.mxu0 %v2451
    %2475 = vmatprep.subr.bf16.mxu0 0
    %2476 = vmatpush1.bf16.msra.mxu0 %v2452
    %2477 = vmatprep.subr.bf16.mxu0 0
    %2478 = vmatpush1.bf16.msra.mxu0 0
    %2479 = vmatprep.subr.bf16.mxu0 0
    %2480 = vmatpush1.bf16.msra.mxu0 0
    %2481 = vmatprep.subr.bf16.mxu0 0
    %2482 = vmatpush1.bf16.msra.mxu0 0
    %2483 = vmatprep.subr.bf16.mxu0 0
    %2484 = vmatpush1.bf16.msra.mxu0 0
    %2485 = vmatprep.subr.bf16.mxu0 0
    %2486 = vmatpush1.bf16.msra.mxu0 0
    %2487 = vmatprep.subr.bf16.mxu0 0
    %2488 = vmatpush1.bf16.msra.mxu0 0
    %2489 = vmatprep.subr.bf16.mxu0 0
    %2490 = vmatpush1.bf16.msra.mxu0 0
    %2491 = vmatprep.subr.bf16.mxu0 0
    %2492 = vmatpush1.bf16.msra.mxu0 0
    %2493 = vmatprep.mubr.bf16.mxu0 0
    %2494 = vmatmul.mubr.bf16.gmra.mrb[0].mxu0 %v2410
    %v2495 = vpop.f32.mrb[0].mxu0
    %v2496 = vadd.f32 0.0, %v2495
    %v2497 = vpop.f32.mrb[0].mxu0
    %v2498 = vpop.f32.mrb[0].mxu0
    %v2499 = vpop.f32.mrb[0].mxu0
    %2500 = vdwg.mxu0
    %v2501 = vadd.f32 %v2391, %v2496
    %s2502 = scalar_lea.vmem [#allocation11], 128
    %v2503 = vld [vmem:[%s2502] sm:$0xf]
    %v2504 = vld [vmem:[%s2502 + $0x4] sm:$0xf]
    %v2505 = vld [vmem:[%s2502 + $0x8] sm:$0xf]
    %v2506 = vld [vmem:[%s2502 + $0xc] sm:$0xf]
    %v2507 = vld [vmem:[%s2502 + $0x10] sm:$0xf]
    %v2508 = vld [vmem:[%s2502 + $0x14] sm:$0xf]
    %v2509 = vld [vmem:[%s2502 + $0x18] sm:$0xf]
    %v2510 = vld [vmem:[%s2502 + $0x1c] sm:$0xf]
    %v2511 = vld [vmem:[%s2502 + $0x20] sm:$0xf]
    %v2512 = vld [vmem:[%s2502 + $0x24] sm:$0xf]
    %v2513 = vld [vmem:[%s2502 + $0x28] sm:$0xf]
    %v2514 = vld [vmem:[%s2502 + $0x2c] sm:$0xf]
    %v2515 = vld [vmem:[%s2502 + $0x30] sm:$0xf]
    %v2516 = vld [vmem:[%s2502 + $0x34] sm:$0xf]
    %v2517 = vld [vmem:[%s2502 + $0x38] sm:$0xf]
    %v2518 = vld [vmem:[%s2502 + $0x3c] sm:$0xf]
    %v2520 = vrot.slane %v2285, 1
    %v2538 = vunpack.c.l.b16 %v2503
    %v2539 = vunpack.c.l.b16 %v2504
    %v2540 = vunpack.c.l.b16 %v2505
    %v2541 = vunpack.c.l.b16 %v2506
    %v2542 = vunpack.c.l.b16 %v2507
    %v2543 = vunpack.c.l.b16 %v2508
    %v2544 = vunpack.c.l.b16 %v2509
    %v2545 = vunpack.c.l.b16 %v2510
    %v2546 = vunpack.c.l.b16 %v2511
    %v2547 = vunpack.c.l.b16 %v2512
    %v2548 = vunpack.c.l.b16 %v2513
    %v2549 = vunpack.c.l.b16 %v2514
    %v2550 = vunpack.c.l.b16 %v2515
    %v2551 = vunpack.c.l.b16 %v2516
    %v2552 = vunpack.c.l.b16 %v2517
    %v2553 = vunpack.c.l.b16 %v2518
    %v2554 = vpack.c.b16 %v2539, %v2538
    %v2555 = vpack.c.b16 %v2541, %v2540
    %v2556 = vpack.c.b16 %v2543, %v2542
    %v2557 = vpack.c.b16 %v2545, %v2544
    %v2558 = vpack.c.b16 %v2547, %v2546
    %v2559 = vpack.c.b16 %v2549, %v2548
    %v2560 = vpack.c.b16 %v2551, %v2550
    %v2561 = vpack.c.b16 %v2553, %v2552
    %2570 = vmatprep.subr.bf16.mxu0 0
    %2571 = vmatpush1.bf16.msra.mxu0 %v2554
    %2572 = vmatprep.subr.bf16.mxu0 0
    %2573 = vmatpush1.bf16.msra.mxu0 %v2555
    %2574 = vmatprep.subr.bf16.mxu0 0
    %2575 = vmatpush1.bf16.msra.mxu0 %v2556
    %2576 = vmatprep.subr.bf16.mxu0 0
    %2577 = vmatpush1.bf16.msra.mxu0 %v2557
    %2578 = vmatprep.subr.bf16.mxu0 0
    %2579 = vmatpush1.bf16.msra.mxu0 %v2558
    %2580 = vmatprep.subr.bf16.mxu0 0
    %2581 = vmatpush1.bf16.msra.mxu0 %v2559
    %2582 = vmatprep.subr.bf16.mxu0 0
    %2583 = vmatpush1.bf16.msra.mxu0 %v2560
    %2584 = vmatprep.subr.bf16.mxu0 0
    %2585 = vmatpush1.bf16.msra.mxu0 %v2561
    %2586 = vmatprep.subr.bf16.mxu0 0
    %2587 = vmatpush1.bf16.msra.mxu0 0
    %2588 = vmatprep.subr.bf16.mxu0 0
    %2589 = vmatpush1.bf16.msra.mxu0 0
    %2590 = vmatprep.subr.bf16.mxu0 0
    %2591 = vmatpush1.bf16.msra.mxu0 0
    %2592 = vmatprep.subr.bf16.mxu0 0
    %2593 = vmatpush1.bf16.msra.mxu0 0
    %2594 = vmatprep.subr.bf16.mxu0 0
    %2595 = vmatpush1.bf16.msra.mxu0 0
    %2596 = vmatprep.subr.bf16.mxu0 0
    %2597 = vmatpush1.bf16.msra.mxu0 0
    %2598 = vmatprep.subr.bf16.mxu0 0
    %2599 = vmatpush1.bf16.msra.mxu0 0
    %2600 = vmatprep.subr.bf16.mxu0 0
    %2601 = vmatpush1.bf16.msra.mxu0 0
    %2602 = vmatprep.mubr.bf16.mxu0 0
    %2603 = vmatmul.mubr.bf16.gmra.mrb[0].mxu0 %v2520
    %v2604 = vpop.f32.mrb[0].mxu0
    %v2605 = vadd.f32 0.0, %v2604
    %v2606 = vpop.f32.mrb[0].mxu0
    %v2607 = vpop.f32.mrb[0].mxu0
    %v2608 = vpop.f32.mrb[0].mxu0
    %2609 = vdwg.mxu0
    %v2610 = vadd.f32 %v2501, %v2605
    %s2611 = scalar_lea.vmem [#allocation11], 192
    %v2612 = vld [vmem:[%s2611] sm:$0xf]
    %v2613 = vld [vmem:[%s2611 + $0x4] sm:$0xf]
    %v2614 = vld [vmem:[%s2611 + $0x8] sm:$0xf]
    %v2615 = vld [vmem:[%s2611 + $0xc] sm:$0xf]
    %v2616 = vld [vmem:[%s2611 + $0x10] sm:$0xf]
    %v2617 = vld [vmem:[%s2611 + $0x14] sm:$0xf]
    %v2618 = vld [vmem:[%s2611 + $0x18] sm:$0xf]
    %v2619 = vld [vmem:[%s2611 + $0x1c] sm:$0xf]
    %v2620 = vld [vmem:[%s2611 + $0x20] sm:$0xf]
    %v2621 = vld [vmem:[%s2611 + $0x24] sm:$0xf]
    %v2622 = vld [vmem:[%s2611 + $0x28] sm:$0xf]
    %v2623 = vld [vmem:[%s2611 + $0x2c] sm:$0xf]
    %v2624 = vld [vmem:[%s2611 + $0x30] sm:$0xf]
    %v2625 = vld [vmem:[%s2611 + $0x34] sm:$0xf]
    %v2626 = vld [vmem:[%s2611 + $0x38] sm:$0xf]
    %v2627 = vld [vmem:[%s2611 + $0x3c] sm:$0xf]
    %v2628 = vrot.slane %v2410, 1
    %v2646 = vunpack.c.l.b16 %v2612
    %v2647 = vunpack.c.l.b16 %v2613
    %v2648 = vunpack.c.l.b16 %v2614
    %v2649 = vunpack.c.l.b16 %v2615
    %v2650 = vunpack.c.l.b16 %v2616
    %v2651 = vunpack.c.l.b16 %v2617
    %v2652 = vunpack.c.l.b16 %v2618
    %v2653 = vunpack.c.l.b16 %v2619
    %v2654 = vunpack.c.l.b16 %v2620
    %v2655 = vunpack.c.l.b16 %v2621
    %v2656 = vunpack.c.l.b16 %v2622
    %v2657 = vunpack.c.l.b16 %v2623
    %v2658 = vunpack.c.l.b16 %v2624
    %v2659 = vunpack.c.l.b16 %v2625
    %v2660 = vunpack.c.l.b16 %v2626
    %v2661 = vunpack.c.l.b16 %v2627
    %v2662 = vpack.c.b16 %v2647, %v2646
    %v2663 = vpack.c.b16 %v2649, %v2648
    %v2664 = vpack.c.b16 %v2651, %v2650
    %v2665 = vpack.c.b16 %v2653, %v2652
    %v2666 = vpack.c.b16 %v2655, %v2654
    %v2667 = vpack.c.b16 %v2657, %v2656
    %v2668 = vpack.c.b16 %v2659, %v2658
    %v2669 = vpack.c.b16 %v2661, %v2660
    %2678 = vmatprep.subr.bf16.mxu0 0
    %2679 = vmatpush1.bf16.msra.mxu0 %v2662
    %2680 = vmatprep.subr.bf16.mxu0 0
    %2681 = vmatpush1.bf16.msra.mxu0 %v2663
    %2682 = vmatprep.subr.bf16.mxu0 0
    %2683 = vmatpush1.bf16.msra.mxu0 %v2664
    %2684 = vmatprep.subr.bf16.mxu0 0
    %2685 = vmatpush1.bf16.msra.mxu0 %v2665
    %2686 = vmatprep.subr.bf16.mxu0 0
    %2687 = vmatpush1.bf16.msra.mxu0 %v2666
    %2688 = vmatprep.subr.bf16.mxu0 0
    %2689 = vmatpush1.bf16.msra.mxu0 %v2667
    %2690 = vmatprep.subr.bf16.mxu0 0
    %2691 = vmatpush1.bf16.msra.mxu0 %v2668
    %2692 = vmatprep.subr.bf16.mxu0 0
    %2693 = vmatpush1.bf16.msra.mxu0 %v2669
    %2694 = vmatprep.subr.bf16.mxu0 0
    %2695 = vmatpush1.bf16.msra.mxu0 0
    %2696 = vmatprep.subr.bf16.mxu0 0
    %2697 = vmatpush1.bf16.msra.mxu0 0
    %2698 = vmatprep.subr.bf16.mxu0 0
    %2699 = vmatpush1.bf16.msra.mxu0 0
    %2700 = vmatprep.subr.bf16.mxu0 0
    %2701 = vmatpush1.bf16.msra.mxu0 0
    %2702 = vmatprep.subr.bf16.mxu0 0
    %2703 = vmatpush1.bf16.msra.mxu0 0
    %2704 = vmatprep.subr.bf16.mxu0 0
    %2705 = vmatpush1.bf16.msra.mxu0 0
    %2706 = vmatprep.subr.bf16.mxu0 0
    %2707 = vmatpush1.bf16.msra.mxu0 0
    %2708 = vmatprep.subr.bf16.mxu0 0
    %2709 = vmatpush1.bf16.msra.mxu0 0
    %2710 = vmatprep.mubr.bf16.mxu0 0
    %2711 = vmatmul.mubr.bf16.gmra.mrb[0].mxu0 %v2628
    %v2712 = vpop.f32.mrb[0].mxu0
    %v2713 = vadd.f32 0.0, %v2712
    %v2714 = vpop.f32.mrb[0].mxu0
    %v2715 = vpop.f32.mrb[0].mxu0
    %v2716 = vpop.f32.mrb[0].mxu0
    %2717 = vdwg.mxu0
    %v2718 = vadd.f32 %v2610, %v2713
    %2719 = vst [vmem:[#allocation12] sm:$0x1] %v2718
    // Predicated region
    $region54: #{tpu_custom_call.1} parent=1 // pred_check
      _
    $region55: #{tpu_custom_call.1} parent=1 // pred_check_branch
      %2721 = sbr.rel (0) target = $region57
    $region56: #{tpu_custom_call.1} parent=1 // pred_region
      %s2723 = ssub.s32 16, 16
      %2724 = vsyncadd [#allocation5], %s2723
      %s2726 = sshll.u32 [#allocation12], 4
      %s2727 = int_to_ptr.vmem [resolvable:$true] %s2726
      %2729 = dma.vmem_to_hbm [thread:$0]  %s2727, 16, %s8, [#allocation5]
    $region57: #{tpu_custom_call.1} parent=1 // pred_fallthru
      _
    // Predicated region
    $region58: #{tpu_custom_call.1} parent=1 // pred_check
      _
    $region59: #{tpu_custom_call.1} parent=1 // pred_check_branch
      %2731 = sbr.rel (0) target = $region61
    $region60: #{tpu_custom_call.1} parent=1 // pred_region
      %2732 = dma.done [#allocation5], 16
    $region61: #{tpu_custom_call.1} parent=1 // pred_fallthru
      _
    %2733 = vsyncpa [#allocation4], 1
    %2734 = vsyncpa [#allocation7], 1
    %2735 = vsyncpa [#allocation10], 1
    %2736 = vsyncpa [#allocation5], 1

</llo_original>
